<compile_context>
chip_gen: v7x
topology: tpu7x:2x2x1
jax: 0.10.0
libtpu: 0.0.40
codegen_flags: <defaults>
</compile_context>

<pallas_src>
import jax
import jax.numpy as jnp
from jax.experimental import pallas as pl
from jax.experimental.pallas import tpu as pltpu


def _round_up(x, m):
    return ((x + m - 1) // m) * m


def _polyline_encoder_kernel(
    x_ref, w_pre_ref, e_sel_ref, w1a_ref, w1b_ref, w2_ref,
    wo1_ref, wo2_ref, b1_ref, b2_ref, bo1_ref, bo2_ref,
    out_ref,
):
    T, P4, CK = x_ref.shape                 # CK = 4 * Cp (lane-packed channels)
    H = wo1_ref.shape[1]                    # hidden dim (32)
    L = w1a_ref.shape[1]                    # 4 * H packed hidden lanes (128)

    x = x_ref[...].reshape(T * P4, CK)      # 4 points per row, packed along lanes

    # ---- pre_mlps (BN folded; shift gated by the in-band mask channel) --------
    # Masked / padded points have all channels == 0 (incl. the mask channel that
    # carries b_pre), so h is already exactly 0 for them: no mask multiply needed.
    h = jnp.maximum(
        jnp.dot(x, w_pre_ref[...], preferred_element_type=jnp.float32), 0.0)

    # Lane-expanded point mask (exact {0,1}) via a tiny selection matmul (MXU).
    m_exp = jnp.dot(x, e_sel_ref[...], preferred_element_type=jnp.float32)

    def pool_points(v):                     # max over all points of a polyline
        p = jnp.max(v.reshape(T, P4, L), axis=1)          # packed-row (sublane) max
        p = jnp.maximum(p, pltpu.roll(p, 2 * H, axis=1))  # lane-block max ...
        return jnp.maximum(p, pltpu.roll(p, H, axis=1))   # ... result replicated 4x

    pooled_rep = pool_points(h)                           # (T, L)

    # ---- mlps layer 1: split-weight form of concat([h, pooled]) @ W1 ----------
    ga = jnp.dot(h, w1a_ref[...], preferred_element_type=jnp.float32)
    gb = jnp.dot(pooled_rep, w1b_ref[...],
                 preferred_element_type=jnp.float32) + b1_ref[...]
    g = jnp.maximum(ga.reshape(T, P4, L) + gb[:, None, :], 0.0).reshape(T * P4, L)

    # ---- mlps layer 2 + point mask before the second pool ---------------------
    g2 = jnp.dot(g, w2_ref[...], preferred_element_type=jnp.float32)
    g2 = jnp.maximum(g2 + b2_ref[...], 0.0) * m_exp

    pooled2_rep = pool_points(g2)                         # (T, L)
    valid = pool_points(m_exp)[:, :1]                     # (T, 1): any valid point

    # ---- out_mlps (without_norm, ret_before_act): Linear+ReLU, Linear ---------
    y1 = jnp.maximum(
        jnp.dot(pooled2_rep, wo1_ref[...], preferred_element_type=jnp.float32)
        + bo1_ref[...], 0.0)                              # (T, H)
    y = jnp.dot(y1, wo2_ref[...], preferred_element_type=jnp.float32) + bo2_ref[...]
    out_ref[...] = (y * valid).astype(out_ref.dtype)


def pointnet_polyline_encoder(polylines, polylines_mask, params, *,
                              tile_bn=512, input_dtype=jnp.bfloat16):
    """polylines: (B, N, P, C) f32; polylines_mask: (B, N, P) bool -> (B, N, O) f32."""
    B, N, P, C = polylines.shape
    H = params["w_pre"].shape[1]
    O = params["wo2"].shape[1]
    K = 4                                   # points packed per 128-lane row
    Cp = 8
    while Cp < C + 1:                       # C feature channels + 1 mask channel
        Cp *= 2
    L = K * H                               # packed hidden lane width (128)
    BN = B * N
    P_pad = _round_up(P, K)
    P4 = P_pad // K

    # Tile: multiple of 8, clamped so grid >= 2 when possible (v7x megacore).
    tile = max(8, min(tile_bn, _round_up((BN + 1) // 2, 8)))
    tile = _round_up(tile, 8)
    BN_pad = _round_up(BN, tile)
    grid = BN_pad // tile

    # ---- repack input: (B,N,P,C) -> (BN_pad, P4, K*Cp), mask baked in-band ----
    f32 = jnp.float32
    m = polylines_mask.reshape(BN, P).astype(f32)
    x = polylines.reshape(BN, P, C).astype(f32) * m[:, :, None]      # NaN guard
    x = jnp.concatenate(
        [x, m[:, :, None], jnp.zeros((BN, P, Cp - C - 1), f32)], axis=-1)
    x = jnp.pad(x, ((0, BN_pad - BN), (0, P_pad - P), (0, 0)))
    x = x.reshape(BN_pad, P4, K * Cp).astype(input_dtype)

    # ---- weights: fold BN(eval), build 4x block-diagonal packed matrices ------
    def block_diag(w):
        r, c = w.shape
        out = jnp.zeros((K * r, K * c), f32)
        for j in range(K):
            out = out.at[j * r:(j + 1) * r, j * c:(j + 1) * c].set(w)
        return out

    w_pre_f = params["w_pre"].astype(f32) * params["s_pre"].astype(f32)   # (C, H)
    pre_slot = (jnp.zeros((Cp, H), f32)
                .at[:C].set(w_pre_f)
                .at[C].set(params["b_pre"][0].astype(f32)))   # mask channel -> b_pre
    w_pre_blk = block_diag(pre_slot).astype(input_dtype)                  # (K*Cp, L)
    sel_slot = jnp.zeros((Cp, H), f32).at[C].set(1.0)
    e_sel_blk = block_diag(sel_slot).astype(input_dtype)                  # (K*Cp, L)

    w1_f = params["w1"].astype(f32) * params["s1"].astype(f32)            # (2H, H)
    w1a_blk = block_diag(w1_f[:H])                                        # (L, L)
    w1b_blk = block_diag(w1_f[H:])                                        # (L, L)
    w2_blk = block_diag(params["w2"].astype(f32) * params["s2"].astype(f32))
    b1_t = jnp.tile(params["b1"].astype(f32), (1, K))                     # (1, L)
    b2_t = jnp.tile(params["b2"].astype(f32), (1, K))                     # (1, L)

    wo1_aug = jnp.concatenate(
        [params["wo1"].astype(f32), jnp.zeros((L - H, H), f32)], axis=0)  # (L, H)
    wo2 = params["wo2"].astype(f32)                                       # (H, O)
    bo1 = params["bo1"].astype(f32)                                       # (1, H)
    bo2 = params["bo2"].astype(f32)                                       # (1, O)

    def full(shape):
        n = len(shape)
        return pl.BlockSpec(shape, lambda i, _n=n: (0,) * _n)

    out = pl.pallas_call(
        _polyline_encoder_kernel,
        out_shape=jax.ShapeDtypeStruct((BN_pad, O), jnp.float32),
        grid=(grid,),
        in_specs=[
            pl.BlockSpec((tile, P4, K * Cp), lambda i: (i, 0, 0)),  # packed input
            full((K * Cp, L)), full((K * Cp, L)),                   # w_pre_blk, e_sel
            full((L, L)), full((L, L)), full((L, L)),               # w1a, w1b, w2
            full((L, H)), full((H, O)),                             # wo1_aug, wo2
            full((1, L)), full((1, L)), full((1, H)), full((1, O)), # biases
        ],
        out_specs=pl.BlockSpec((tile, O), lambda i: (i, 0)),
        compiler_params=pltpu.CompilerParams(
            dimension_semantics=("parallel",),
            vmem_limit_bytes=32 * 1024 * 1024,
        ),
    )(x, w_pre_blk, e_sel_blk, w1a_blk, w1b_blk, w2_blk, wo1_aug, wo2,
      b1_t, b2_t, bo1, bo2)

    return out[:BN].reshape(B, N, O)


def _reference(polylines, polylines_mask, p):
    """Pure-JAX mirror of the PyTorch forward (BatchNorm in eval mode, folded)."""
    m = polylines_mask.astype(jnp.float32)[..., None]
    x = polylines * m
    h = jnp.maximum(jnp.einsum("bnpc,ch->bnph", x, p["w_pre"]) * p["s_pre"][0] + p["b_pre"][0], 0.0) * m
    pooled = jnp.max(h, axis=2)
    feat = jnp.concatenate([h, jnp.broadcast_to(pooled[:, :, None, :], h.shape)], axis=-1) * m
    g = jnp.maximum(jnp.einsum("bnpc,ch->bnph", feat, p["w1"]) * p["s1"][0] + p["b1"][0], 0.0)
    g = jnp.maximum(jnp.einsum("bnpc,ch->bnph", g, p["w2"]) * p["s2"][0] + p["b2"][0], 0.0) * m
    pooled2 = jnp.max(g, axis=2)
    valid = (jnp.sum(polylines_mask.astype(jnp.float32), axis=2) > 0).astype(jnp.float32)[..., None]
    y = pooled2 * valid
    y = jnp.maximum(y @ p["wo1"] + p["bo1"][0], 0.0)
    y = y @ p["wo2"] + p["bo2"][0]
    return y * valid


def _init_params(key, in_channels, hidden_dim, out_channels):
    ks = jax.random.split(key, 16)
    H, C, O = hidden_dim, in_channels, out_channels
    n = lambda k, s, sc=0.1: sc * jax.random.normal(k, s, jnp.float32)
    # BatchNorm (eval) folded into scale/shift; scale kept positive.
    return {
        "w_pre": n(ks[0], (C, H)),
        "s_pre": 0.5 + jax.random.uniform(ks[1], (1, H)),
        "b_pre": n(ks[2], (1, H)),
        "w1": n(ks[3], (2 * H, H)),
        "s1": 0.5 + jax.random.uniform(ks[4], (1, H)),
        "b1": n(ks[5], (1, H)),
        "w2": n(ks[6], (H, H)),
        "s2": 0.5 + jax.random.uniform(ks[7], (1, H)),
        "b2": n(ks[8], (1, H)),
        "wo1": n(ks[9], (H, H)),
        "bo1": n(ks[10], (1, H)),
        "wo2": n(ks[11], (H, O)),
        "bo2": n(ks[12], (1, O)),
    }


if __name__ == "__main__":
    C, H, O = 9, 32, 64          # in_channels, hidden_dim, out_channels
    key = jax.random.PRNGKey(0)
    k_poly, k_mask, k_params = jax.random.split(key, 3)
    params = _init_params(k_params, C, H, O)

    B, N, P = 2, 8, 16
    polylines = jax.random.normal(k_poly, (B, N, P, C), jnp.float32)
    polylines_mask = jax.random.uniform(k_mask, (B, N, P)) > 0.3
    polylines_mask = polylines_mask.at[0, 0, :].set(False)   # fully-invalid polyline
    ref = _reference(polylines, polylines_mask, params)

    # --- case 1: f32-streamed input, bit-faithful path ---------------------------
    out = pointnet_polyline_encoder(polylines, polylines_mask, params,
                                    input_dtype=jnp.float32)
    out = jax.block_until_ready(out)
    assert out.shape == (B, N, O), out.shape
    assert jnp.allclose(out, ref, rtol=1e-4, atol=1e-4), float(jnp.max(jnp.abs(out - ref)))

    # --- case 2: odd BN and odd P exercise batch padding, point padding and a ----
    # --- multi-step grid with a small tile ---------------------------------------
    poly2 = polylines[:, :7, :13]
    mask2 = polylines_mask[:, :7, :13]
    out2 = pointnet_polyline_encoder(poly2, mask2, params, tile_bn=8,
                                     input_dtype=jnp.float32)
    out2 = jax.block_until_ready(out2)
    ref2 = _reference(poly2, mask2, params)
    assert out2.shape == (2, 7, O), out2.shape
    assert jnp.allclose(out2, ref2, rtol=1e-4, atol=1e-4), float(jnp.max(jnp.abs(out2 - ref2)))

    # --- case 3: default bf16-streamed input (f32 accumulation / elementwise) ----
    out_bf = pointnet_polyline_encoder(polylines, polylines_mask, params)
    out_bf = jax.block_until_ready(out_bf)
    assert out_bf.shape == (B, N, O), out_bf.shape
    assert jnp.allclose(out_bf, ref, rtol=5e-2, atol=5e-2), \
        float(jnp.max(jnp.abs(out_bf - ref)))

    print("KERNEL_OK")
</pallas_src>

<mosaic_0001>
module attributes {stable_mosaic.version = 11 : i64} {
  func.func @_polyline_encoder_kernel(%arg0: i32, %arg1: memref<8x4x64xf32, #tpu.memory_space<vmem>>, %arg2: memref<64x128xf32, #tpu.memory_space<vmem>>, %arg3: memref<64x128xf32, #tpu.memory_space<vmem>>, %arg4: memref<128x128xf32, #tpu.memory_space<vmem>>, %arg5: memref<128x128xf32, #tpu.memory_space<vmem>>, %arg6: memref<128x128xf32, #tpu.memory_space<vmem>>, %arg7: memref<128x32xf32, #tpu.memory_space<vmem>>, %arg8: memref<32x64xf32, #tpu.memory_space<vmem>>, %arg9: memref<1x128xf32, #tpu.memory_space<vmem>>, %arg10: memref<1x128xf32, #tpu.memory_space<vmem>>, %arg11: memref<1x32xf32, #tpu.memory_space<vmem>>, %arg12: memref<1x64xf32, #tpu.memory_space<vmem>>, %arg13: memref<8x64xf32, #tpu.memory_space<vmem>>) attributes {dimension_semantics = [#tpu.dimension_semantics<parallel>], iteration_bounds = array<i64: 2>, scalar_prefetch = 0 : i64, scratch_operands = 0 : i64, tpu.core_type = #tpu.core_type<tc>, window_params = [{transform_indices = @transform_0, window_bounds = array<i64: 8, 4, 64>}, {pipeline_mode = #tpu.pipeline_mode<synchronous>, transform_indices = @transform_1, window_bounds = array<i64: 64, 128>}, {pipeline_mode = #tpu.pipeline_mode<synchronous>, transform_indices = @transform_2, window_bounds = array<i64: 64, 128>}, {pipeline_mode = #tpu.pipeline_mode<synchronous>, transform_indices = @transform_3, window_bounds = array<i64: 128, 128>}, {pipeline_mode = #tpu.pipeline_mode<synchronous>, transform_indices = @transform_4, window_bounds = array<i64: 128, 128>}, {pipeline_mode = #tpu.pipeline_mode<synchronous>, transform_indices = @transform_5, window_bounds = array<i64: 128, 128>}, {pipeline_mode = #tpu.pipeline_mode<synchronous>, transform_indices = @transform_6, window_bounds = array<i64: 128, 32>}, {pipeline_mode = #tpu.pipeline_mode<synchronous>, transform_indices = @transform_7, window_bounds = array<i64: 32, 64>}, {pipeline_mode = #tpu.pipeline_mode<synchronous>, transform_indices = @transform_8, window_bounds = array<i64: 1, 128>}, {pipeline_mode = #tpu.pipeline_mode<synchronous>, transform_indices = @transform_9, window_bounds = array<i64: 1, 128>}, {pipeline_mode = #tpu.pipeline_mode<synchronous>, transform_indices = @transform_10, window_bounds = array<i64: 1, 32>}, {pipeline_mode = #tpu.pipeline_mode<synchronous>, transform_indices = @transform_11, window_bounds = array<i64: 1, 64>}, {transform_indices = @transform_12, window_bounds = array<i64: 8, 64>}]} {
    %c0 = arith.constant 0 : index
    %c0_0 = arith.constant 0 : index
    %c0_1 = arith.constant 0 : index
    %0 = vector.load %arg1[%c0, %c0_0, %c0_1] : memref<8x4x64xf32, #tpu.memory_space<vmem>>, vector<8x4x64xf32>
    %1 = vector.shape_cast %0 : vector<8x4x64xf32> to vector<32x64xf32>
    %c0_2 = arith.constant 0 : index
    %c0_3 = arith.constant 0 : index
    %2 = vector.load %arg2[%c0_2, %c0_3] : memref<64x128xf32, #tpu.memory_space<vmem>>, vector<64x128xf32>
    %cst = arith.constant dense<0.000000e+00> : vector<32x128xf32>
    %3 = tpu.matmul %1, %2, %cst {dimension_numbers = #tpu.dot_dimension_numbers<[1], [0], [0], [1], [0, 0, 1, 1], [], []>} : vector<32x64xf32>, vector<64x128xf32>, vector<32x128xf32> -> vector<32x128xf32>
    %cst_4 = arith.constant 0.000000e+00 : f32
    %4 = vector.broadcast %cst_4 : f32 to vector<32x128xf32>
    %5 = arith.maximumf %3, %4 : vector<32x128xf32>
    %c0_5 = arith.constant 0 : index
    %c0_6 = arith.constant 0 : index
    %6 = vector.load %arg3[%c0_5, %c0_6] : memref<64x128xf32, #tpu.memory_space<vmem>>, vector<64x128xf32>
    %cst_7 = arith.constant dense<0.000000e+00> : vector<32x128xf32>
    %7 = tpu.matmul %1, %6, %cst_7 {dimension_numbers = #tpu.dot_dimension_numbers<[1], [0], [0], [1], [0, 0, 1, 1], [], []>} : vector<32x64xf32>, vector<64x128xf32>, vector<32x128xf32> -> vector<32x128xf32>
    %8 = vector.shape_cast %5 : vector<32x128xf32> to vector<8x4x128xf32>
    %cst_8 = arith.constant dense<0xFF800000> : vector<8x128xf32>
    %9 = vector.multi_reduction <maximumf>, %8, %cst_8 [1] : vector<8x4x128xf32> to vector<8x128xf32>
    %c64_i32 = arith.constant 64 : i32
    %10 = tpu.dynamic_rotate %9 by %c64_i32 dim 1 : vector<8x128xf32>, i32 -> vector<8x128xf32>
    %11 = arith.maximumf %9, %10 : vector<8x128xf32>
    %c32_i32 = arith.constant 32 : i32
    %12 = tpu.dynamic_rotate %11 by %c32_i32 dim 1 : vector<8x128xf32>, i32 -> vector<8x128xf32>
    %13 = arith.maximumf %11, %12 : vector<8x128xf32>
    %c0_9 = arith.constant 0 : index
    %c0_10 = arith.constant 0 : index
    %14 = vector.load %arg4[%c0_9, %c0_10] : memref<128x128xf32, #tpu.memory_space<vmem>>, vector<128x128xf32>
    %cst_11 = arith.constant dense<0.000000e+00> : vector<32x128xf32>
    %15 = tpu.matmul %5, %14, %cst_11 {dimension_numbers = #tpu.dot_dimension_numbers<[1], [0], [0], [1], [0, 0, 1, 1], [], []>} : vector<32x128xf32>, vector<128x128xf32>, vector<32x128xf32> -> vector<32x128xf32>
    %c0_12 = arith.constant 0 : index
    %c0_13 = arith.constant 0 : index
    %16 = vector.load %arg5[%c0_12, %c0_13] : memref<128x128xf32, #tpu.memory_space<vmem>>, vector<128x128xf32>
    %cst_14 = arith.constant dense<0.000000e+00> : vector<8x128xf32>
    %17 = tpu.matmul %13, %16, %cst_14 {dimension_numbers = #tpu.dot_dimension_numbers<[1], [0], [0], [1], [0, 0, 1, 1], [], []>} : vector<8x128xf32>, vector<128x128xf32>, vector<8x128xf32> -> vector<8x128xf32>
    %c0_15 = arith.constant 0 : index
    %c0_16 = arith.constant 0 : index
    %18 = vector.load %arg9[%c0_15, %c0_16] : memref<1x128xf32, #tpu.memory_space<vmem>>, vector<1x128xf32>
    %19 = vector.broadcast %18 : vector<1x128xf32> to vector<8x128xf32>
    %20 = arith.addf %17, %19 : vector<8x128xf32>
    %21 = vector.shape_cast %15 : vector<32x128xf32> to vector<8x4x128xf32>
    %22 = vector.shape_cast %20 : vector<8x128xf32> to vector<8x1x128xf32>
    %23 = vector.broadcast %22 : vector<8x1x128xf32> to vector<8x4x128xf32>
    %24 = arith.addf %21, %23 : vector<8x4x128xf32>
    %cst_17 = arith.constant 0.000000e+00 : f32
    %25 = vector.broadcast %cst_17 : f32 to vector<8x4x128xf32>
    %26 = arith.maximumf %24, %25 : vector<8x4x128xf32>
    %27 = vector.shape_cast %26 : vector<8x4x128xf32> to vector<32x128xf32>
    %c0_18 = arith.constant 0 : index
    %c0_19 = arith.constant 0 : index
    %28 = vector.load %arg6[%c0_18, %c0_19] : memref<128x128xf32, #tpu.memory_space<vmem>>, vector<128x128xf32>
    %cst_20 = arith.constant dense<0.000000e+00> : vector<32x128xf32>
    %29 = tpu.matmul %27, %28, %cst_20 {dimension_numbers = #tpu.dot_dimension_numbers<[1], [0], [0], [1], [0, 0, 1, 1], [], []>} : vector<32x128xf32>, vector<128x128xf32>, vector<32x128xf32> -> vector<32x128xf32>
    %c0_21 = arith.constant 0 : index
    %c0_22 = arith.constant 0 : index
    %30 = vector.load %arg10[%c0_21, %c0_22] : memref<1x128xf32, #tpu.memory_space<vmem>>, vector<1x128xf32>
    %31 = vector.broadcast %30 : vector<1x128xf32> to vector<32x128xf32>
    %32 = arith.addf %29, %31 : vector<32x128xf32>
    %cst_23 = arith.constant 0.000000e+00 : f32
    %33 = vector.broadcast %cst_23 : f32 to vector<32x128xf32>
    %34 = arith.maximumf %32, %33 : vector<32x128xf32>
    %35 = arith.mulf %34, %7 : vector<32x128xf32>
    %36 = vector.shape_cast %35 : vector<32x128xf32> to vector<8x4x128xf32>
    %cst_24 = arith.constant dense<0xFF800000> : vector<8x128xf32>
    %37 = vector.multi_reduction <maximumf>, %36, %cst_24 [1] : vector<8x4x128xf32> to vector<8x128xf32>
    %c64_i32_25 = arith.constant 64 : i32
    %38 = tpu.dynamic_rotate %37 by %c64_i32_25 dim 1 : vector<8x128xf32>, i32 -> vector<8x128xf32>
    %39 = arith.maximumf %37, %38 : vector<8x128xf32>
    %c32_i32_26 = arith.constant 32 : i32
    %40 = tpu.dynamic_rotate %39 by %c32_i32_26 dim 1 : vector<8x128xf32>, i32 -> vector<8x128xf32>
    %41 = arith.maximumf %39, %40 : vector<8x128xf32>
    %42 = vector.shape_cast %7 : vector<32x128xf32> to vector<8x4x128xf32>
    %cst_27 = arith.constant dense<0xFF800000> : vector<8x128xf32>
    %43 = vector.multi_reduction <maximumf>, %42, %cst_27 [1] : vector<8x4x128xf32> to vector<8x128xf32>
    %c64_i32_28 = arith.constant 64 : i32
    %44 = tpu.dynamic_rotate %43 by %c64_i32_28 dim 1 : vector<8x128xf32>, i32 -> vector<8x128xf32>
    %45 = arith.maximumf %43, %44 : vector<8x128xf32>
    %c32_i32_29 = arith.constant 32 : i32
    %46 = tpu.dynamic_rotate %45 by %c32_i32_29 dim 1 : vector<8x128xf32>, i32 -> vector<8x128xf32>
    %47 = arith.maximumf %45, %46 : vector<8x128xf32>
    %48 = vector.extract_strided_slice %47 {offsets = [0, 0], sizes = [8, 1], strides = [1, 1]} : vector<8x128xf32> to vector<8x1xf32>
    %c0_30 = arith.constant 0 : index
    %c0_31 = arith.constant 0 : index
    %49 = vector.load %arg7[%c0_30, %c0_31] : memref<128x32xf32, #tpu.memory_space<vmem>>, vector<128x32xf32>
    %cst_32 = arith.constant dense<0.000000e+00> : vector<8x32xf32>
    %50 = tpu.matmul %41, %49, %cst_32 {dimension_numbers = #tpu.dot_dimension_numbers<[1], [0], [0], [1], [0, 0, 1, 1], [], []>} : vector<8x128xf32>, vector<128x32xf32>, vector<8x32xf32> -> vector<8x32xf32>
    %c0_33 = arith.constant 0 : index
    %c0_34 = arith.constant 0 : index
    %51 = vector.load %arg11[%c0_33, %c0_34] : memref<1x32xf32, #tpu.memory_space<vmem>>, vector<1x32xf32>
    %52 = vector.broadcast %51 : vector<1x32xf32> to vector<8x32xf32>
    %53 = arith.addf %50, %52 : vector<8x32xf32>
    %cst_35 = arith.constant 0.000000e+00 : f32
    %54 = vector.broadcast %cst_35 : f32 to vector<8x32xf32>
    %55 = arith.maximumf %53, %54 : vector<8x32xf32>
    %c0_36 = arith.constant 0 : index
    %c0_37 = arith.constant 0 : index
    %56 = vector.load %arg8[%c0_36, %c0_37] : memref<32x64xf32, #tpu.memory_space<vmem>>, vector<32x64xf32>
    %cst_38 = arith.constant dense<0.000000e+00> : vector<8x64xf32>
    %57 = tpu.matmul %55, %56, %cst_38 {dimension_numbers = #tpu.dot_dimension_numbers<[1], [0], [0], [1], [0, 0, 1, 1], [], []>} : vector<8x32xf32>, vector<32x64xf32>, vector<8x64xf32> -> vector<8x64xf32>
    %c0_39 = arith.constant 0 : index
    %c0_40 = arith.constant 0 : index
    %58 = vector.load %arg12[%c0_39, %c0_40] : memref<1x64xf32, #tpu.memory_space<vmem>>, vector<1x64xf32>
    %59 = vector.broadcast %58 : vector<1x64xf32> to vector<8x64xf32>
    %60 = arith.addf %57, %59 : vector<8x64xf32>
    %61 = vector.broadcast %48 : vector<8x1xf32> to vector<8x64xf32>
    %62 = arith.mulf %60, %61 : vector<8x64xf32>
    %c0_41 = arith.constant 0 : index
    %c0_42 = arith.constant 0 : index
    %63 = vector.load %arg13[%c0_41, %c0_42] : memref<8x64xf32, #tpu.memory_space<vmem>>, vector<8x64xf32>
    tpu.vector_store %arg13[%c0_41, %c0_42], %62 {strides = array<i32>} : memref<8x64xf32, #tpu.memory_space<vmem>>, vector<8x64xf32>,
    return
  }
  func.func @transform_0(%arg0: i32) -> (i32, i32, i32) {
    %c0_i32 = arith.constant 0 : i32
    %c0_i32_0 = arith.constant 0 : i32
    %c0_i32_1 = arith.constant 0 : i32
    return %arg0, %c0_i32, %c0_i32_0 : i32, i32, i32
  }
  func.func @transform_1(%arg0: i32) -> (i32, i32) {
    %c0_i32 = arith.constant 0 : i32
    %c0_i32_0 = arith.constant 0 : i32
    %c0_i32_1 = arith.constant 0 : i32
    return %c0_i32, %c0_i32_0 : i32, i32
  }
  func.func @transform_2(%arg0: i32) -> (i32, i32) {
    %c0_i32 = arith.constant 0 : i32
    %c0_i32_0 = arith.constant 0 : i32
    %c0_i32_1 = arith.constant 0 : i32
    return %c0_i32, %c0_i32_0 : i32, i32
  }
  func.func @transform_3(%arg0: i32) -> (i32, i32) {
    %c0_i32 = arith.constant 0 : i32
    %c0_i32_0 = arith.constant 0 : i32
    %c0_i32_1 = arith.constant 0 : i32
    return %c0_i32, %c0_i32_0 : i32, i32
  }
  func.func @transform_4(%arg0: i32) -> (i32, i32) {
    %c0_i32 = arith.constant 0 : i32
    %c0_i32_0 = arith.constant 0 : i32
    %c0_i32_1 = arith.constant 0 : i32
    return %c0_i32, %c0_i32_0 : i32, i32
  }
  func.func @transform_5(%arg0: i32) -> (i32, i32) {
    %c0_i32 = arith.constant 0 : i32
    %c0_i32_0 = arith.constant 0 : i32
    %c0_i32_1 = arith.constant 0 : i32
    return %c0_i32, %c0_i32_0 : i32, i32
  }
  func.func @transform_6(%arg0: i32) -> (i32, i32) {
    %c0_i32 = arith.constant 0 : i32
    %c0_i32_0 = arith.constant 0 : i32
    %c0_i32_1 = arith.constant 0 : i32
    return %c0_i32, %c0_i32_0 : i32, i32
  }
  func.func @transform_7(%arg0: i32) -> (i32, i32) {
    %c0_i32 = arith.constant 0 : i32
    %c0_i32_0 = arith.constant 0 : i32
    %c0_i32_1 = arith.constant 0 : i32
    return %c0_i32, %c0_i32_0 : i32, i32
  }
  func.func @transform_8(%arg0: i32) -> (i32, i32) {
    %c0_i32 = arith.constant 0 : i32
    %c0_i32_0 = arith.constant 0 : i32
    %c0_i32_1 = arith.constant 0 : i32
    return %c0_i32, %c0_i32_0 : i32, i32
  }
  func.func @transform_9(%arg0: i32) -> (i32, i32) {
    %c0_i32 = arith.constant 0 : i32
    %c0_i32_0 = arith.constant 0 : i32
    %c0_i32_1 = arith.constant 0 : i32
    return %c0_i32, %c0_i32_0 : i32, i32
  }
  func.func @transform_10(%arg0: i32) -> (i32, i32) {
    %c0_i32 = arith.constant 0 : i32
    %c0_i32_0 = arith.constant 0 : i32
    %c0_i32_1 = arith.constant 0 : i32
    return %c0_i32, %c0_i32_0 : i32, i32
  }
  func.func @transform_11(%arg0: i32) -> (i32, i32) {
    %c0_i32 = arith.constant 0 : i32
    %c0_i32_0 = arith.constant 0 : i32
    %c0_i32_1 = arith.constant 0 : i32
    return %c0_i32, %c0_i32_0 : i32, i32
  }
  func.func @transform_12(%arg0: i32) -> (i32, i32) {
    %c0_i32 = arith.constant 0 : i32
    %c0_i32_0 = arith.constant 0 : i32
    return %arg0, %c0_i32 : i32, i32
  }
}

</mosaic_0001>

<llo_original>
// kernel: tpu_custom_call.1
$region0: #{tpu_custom_call.1}
  #allocation0 [shape = 'u32[]', space=smem, size = 0x4, offset = 0x4, fixed_abs, tag = 'smem constant byte address 0x4 - core index']
  #allocation1 [shape = 'u32[144,128]{1,0:T(1,128)}', space=vmem, size = 0x12000, scoped, tag = 'internal scratch']
  %s0 = inlined_call_operand.hbm [shape: f32[16,4,64], index: 0, kind: input, shape index: {}]
  %s1 = inlined_call_operand.hbm [shape: f32[64,128], index: 1, kind: input, shape index: {}]
  %s2 = inlined_call_operand.hbm [shape: f32[64,128], index: 2, kind: input, shape index: {}]
  %s3 = inlined_call_operand.vmem [shape: f32[128,128], index: 3, kind: input, shape index: {}]
  %s4 = inlined_call_operand.hbm [shape: f32[128,128], index: 4, kind: input, shape index: {}]
  %s5 = inlined_call_operand.hbm [shape: f32[128,128], index: 5, kind: input, shape index: {}]
  %s6 = inlined_call_operand.vmem [shape: f32[128,32], index: 6, kind: input, shape index: {}]
  %s7 = inlined_call_operand.vmem [shape: f32[32,64], index: 7, kind: input, shape index: {}]
  %s8 = inlined_call_operand.vmem [shape: f32[1,128], index: 8, kind: input, shape index: {}]
  %s9 = inlined_call_operand.vmem [shape: f32[1,128], index: 9, kind: input, shape index: {}]
  %s10 = inlined_call_operand.vmem [shape: f32[1,32], index: 10, kind: input, shape index: {}]
  %s11 = inlined_call_operand.vmem [shape: f32[1,64], index: 11, kind: input, shape index: {}]
  %s12 = inlined_call_operand.hbm [shape: f32[16,64], index: 12, kind: output, shape index: {}]
  %s13 = sld [smem:[#allocation0]]
  $region101: #{tpu_custom_call.1} parent=0
    _
  %s15 = ssub.s32 1, %s13
  %s16 = scalar_select 0, %s15, %s13
  $region1: #{tpu_custom_call.1} parent=0
    #allocation2 [shape = 'u8[32768]{0}', space=vmem, size = 0x8000, scoped, tag = 'input window, operand 0']
    #allocation3 [shape = 's32[2]{0}', space=sflag, size = 0x8, scoped, tag = 'scoped memory for tpu_custom_call.1']
    #allocation4 [shape = 's32[2]{0}', space=sflag, size = 0x8, scoped, tag = 'scoped memory for tpu_custom_call.1']
    #allocation5 [shape = 'u8[32768]{0}', space=vmem, size = 0x8000, scoped, tag = 'input window, operand 1, single buffered']
    #allocation6 [shape = 's32[1]{0}', space=sflag, size = 0x4, scoped, tag = 'scoped memory for tpu_custom_call.1']
    #allocation7 [shape = 'u8[32768]{0}', space=vmem, size = 0x8000, scoped, tag = 'input window, operand 2, single buffered']
    #allocation8 [shape = 'u8[65536]{0}', space=vmem, size = 0x10000, scoped, tag = 'input window, operand 4, single buffered']
    #allocation9 [shape = 's32[1]{0}', space=sflag, size = 0x4, scoped, tag = 'scoped memory for tpu_custom_call.1']
    #allocation10 [shape = 'u8[65536]{0}', space=vmem, size = 0x10000, scoped, tag = 'input window, operand 5, single buffered']
    #allocation11 [shape = 'u8[8192]{0}', space=vmem, size = 0x2000, scoped, tag = 'output window, operand 0']
    %17 = vsyncpa [#allocation3], 0
    %s18 = scalar_lea.sflag [#allocation3], 1
    %19 = vsyncpa %s18, 0
    %20 = vsyncpa [#allocation6], 0
    %21 = vsyncpa [#allocation9], 0
    %22 = vsyncpa [#allocation4], 0
    %s23 = scalar_lea.sflag [#allocation4], 1
    %24 = vsyncpa %s23, 0
    loop: start=0, step=1, limit=4
    $region2: #{tpu_custom_call.1} parent=1 // loop_pre_header
      _
    $region3: #{tpu_custom_call.1} parent=1 // loop_header
      %s26 = sphi 0, %s30
      %p27 = scmp.ge.s32.totalorder %s26, 4
      %s36 = sphi 0, %s38
      %s39 = sphi 0, %s36
      %s40 = sphi 0, %s39
      %s56 = sphi 0, %s40
      %s60 = sphi 0, %s60
      %s62 = sphi 0, %s60
      %s63 = sphi 0, %s62
      %s77 = sphi 0, %s63
      %s81 = sphi 0, %s81
      %s83 = sphi 0, %s81
      %s84 = sphi 0, %s83
      %s98 = sphi 0, %s84
      %s102 = sphi 0, %s102
      %s104 = sphi 0, %s102
      %s105 = sphi 0, %s104
      %s119 = sphi 0, %s105
      %s123 = sphi 0, %s123
      %s125 = sphi 0, %s123
      %s126 = sphi 0, %s125
      %s140 = sphi 0, %s126
      %s144 = sphi 0, %s144
      %s146 = sphi 0, %s144
      %s147 = sphi 0, %s146
      %s161 = sphi 0, %s147
      %s165 = sphi 0, %s165
      %s167 = sphi 0, %s165
      %s168 = sphi 0, %s167
      %s182 = sphi 0, %s168
      %s186 = sphi 0, %s186
      %s188 = sphi 0, %s186
      %s189 = sphi 0, %s188
      %s203 = sphi 0, %s189
      %s207 = sphi 0, %s207
      %s209 = sphi 0, %s207
      %s210 = sphi 0, %s209
      %s224 = sphi 0, %s210
      %s228 = sphi 0, %s228
      %s230 = sphi 0, %s228
      %s231 = sphi 0, %s230
      %s245 = sphi 0, %s231
      %s249 = sphi 0, %s249
      %s251 = sphi 0, %s249
      %s252 = sphi 0, %s251
      %s266 = sphi 0, %s252
      %s270 = sphi 0, %s270
      %s272 = sphi 0, %s270
      %s273 = sphi 0, %s272
      %s287 = sphi 0, %s273
      %s293 = sphi 0, %s295
      %s296 = sphi 0, %s293
      %s297 = sphi 0, %s296
      %s313 = sphi 0, %s297
    $region4: #{tpu_custom_call.1} parent=1 // loop_header_branch
      %29 = sbr.rel (%p27) target = $region8
    $region5: #{tpu_custom_call.1} parent=1 // loop_body
      %s31 = ssub.s32 %s26, 1
      %s32 = ssub.s32 %s26, 2
      %s33 = sadd.s32 %s26, 1
      %s34 = ssub.s32 %s26, %s33
      %p35 = scmp.eq.s32.totalorder %s34, 0
      %s37 = sadd.s32 %s36, 1
      %s38 = scalar_select %p35, %s36, %s37
      %p41 = pneg %p35
      %p42 = scmp.eq.s32.totalorder %s26, 1
      %p43 = por %p41, %p42
      %p44 = scmp.ne.s32.totalorder %s36, %s39
      %p45 = scmp.eq.s32.totalorder %s26, 0
      %p46 = por %p44, %p45
      %p47 = scmp.ne.s32.totalorder %s36, %s39
      %p48 = scmp.eq.s32.totalorder %s31, 1
      %p49 = por %p47, %p48
      %p50 = scmp.ne.s32.totalorder %s39, %s40
      %p51 = scmp.eq.s32.totalorder %s31, 0
      %p52 = por %p50, %p51
      %p53 = scmp.ne.s32.totalorder %s39, %s40
      %p54 = scmp.eq.s32.totalorder %s32, 1
      %p55 = por %p53, %p54
      %p57 = scmp.ne.s32.totalorder %s40, %s56
      %p58 = scmp.eq.s32.totalorder %s32, 0
      %p59 = por %p57, %p58
      %s61 = sadd.s32 %s60, 1
      %p64 = scmp.eq.s32.totalorder %s26, 1
      %p65 = scmp.ne.s32.totalorder %s60, %s62
      %p66 = scmp.eq.s32.totalorder %s26, 0
      %p67 = por %p65, %p66
      %p68 = scmp.ne.s32.totalorder %s60, %s62
      %p69 = scmp.eq.s32.totalorder %s31, 1
      %p70 = por %p68, %p69
      %p71 = scmp.ne.s32.totalorder %s62, %s63
      %p72 = scmp.eq.s32.totalorder %s31, 0
      %p73 = por %p71, %p72
      %p74 = scmp.ne.s32.totalorder %s62, %s63
      %p75 = scmp.eq.s32.totalorder %s32, 1
      %p76 = por %p74, %p75
      %p78 = scmp.ne.s32.totalorder %s63, %s77
      %p79 = scmp.eq.s32.totalorder %s32, 0
      %p80 = por %p78, %p79
      %s82 = sadd.s32 %s81, 1
      %p85 = scmp.eq.s32.totalorder %s26, 1
      %p86 = scmp.ne.s32.totalorder %s81, %s83
      %p87 = scmp.eq.s32.totalorder %s26, 0
      %p88 = por %p86, %p87
      %p89 = scmp.ne.s32.totalorder %s81, %s83
      %p90 = scmp.eq.s32.totalorder %s31, 1
      %p91 = por %p89, %p90
      %p92 = scmp.ne.s32.totalorder %s83, %s84
      %p93 = scmp.eq.s32.totalorder %s31, 0
      %p94 = por %p92, %p93
      %p95 = scmp.ne.s32.totalorder %s83, %s84
      %p96 = scmp.eq.s32.totalorder %s32, 1
      %p97 = por %p95, %p96
      %p99 = scmp.ne.s32.totalorder %s84, %s98
      %p100 = scmp.eq.s32.totalorder %s32, 0
      %p101 = por %p99, %p100
      %s103 = sadd.s32 %s102, 1
      %p106 = scmp.eq.s32.totalorder %s26, 1
      %p107 = scmp.ne.s32.totalorder %s102, %s104
      %p108 = scmp.eq.s32.totalorder %s26, 0
      %p109 = por %p107, %p108
      %p110 = scmp.ne.s32.totalorder %s102, %s104
      %p111 = scmp.eq.s32.totalorder %s31, 1
      %p112 = por %p110, %p111
      %p113 = scmp.ne.s32.totalorder %s104, %s105
      %p114 = scmp.eq.s32.totalorder %s31, 0
      %p115 = por %p113, %p114
      %p116 = scmp.ne.s32.totalorder %s104, %s105
      %p117 = scmp.eq.s32.totalorder %s32, 1
      %p118 = por %p116, %p117
      %p120 = scmp.ne.s32.totalorder %s105, %s119
      %p121 = scmp.eq.s32.totalorder %s32, 0
      %p122 = por %p120, %p121
      %s124 = sadd.s32 %s123, 1
      %p127 = scmp.eq.s32.totalorder %s26, 1
      %p128 = scmp.ne.s32.totalorder %s123, %s125
      %p129 = scmp.eq.s32.totalorder %s26, 0
      %p130 = por %p128, %p129
      %p131 = scmp.ne.s32.totalorder %s123, %s125
      %p132 = scmp.eq.s32.totalorder %s31, 1
      %p133 = por %p131, %p132
      %p134 = scmp.ne.s32.totalorder %s125, %s126
      %p135 = scmp.eq.s32.totalorder %s31, 0
      %p136 = por %p134, %p135
      %p137 = scmp.ne.s32.totalorder %s125, %s126
      %p138 = scmp.eq.s32.totalorder %s32, 1
      %p139 = por %p137, %p138
      %p141 = scmp.ne.s32.totalorder %s126, %s140
      %p142 = scmp.eq.s32.totalorder %s32, 0
      %p143 = por %p141, %p142
      %s145 = sadd.s32 %s144, 1
      %p148 = scmp.eq.s32.totalorder %s26, 1
      %p149 = scmp.ne.s32.totalorder %s144, %s146
      %p150 = scmp.eq.s32.totalorder %s26, 0
      %p151 = por %p149, %p150
      %p152 = scmp.ne.s32.totalorder %s144, %s146
      %p153 = scmp.eq.s32.totalorder %s31, 1
      %p154 = por %p152, %p153
      %p155 = scmp.ne.s32.totalorder %s146, %s147
      %p156 = scmp.eq.s32.totalorder %s31, 0
      %p157 = por %p155, %p156
      %p158 = scmp.ne.s32.totalorder %s146, %s147
      %p159 = scmp.eq.s32.totalorder %s32, 1
      %p160 = por %p158, %p159
      %p162 = scmp.ne.s32.totalorder %s147, %s161
      %p163 = scmp.eq.s32.totalorder %s32, 0
      %p164 = por %p162, %p163
      %s166 = sadd.s32 %s165, 1
      %p169 = scmp.eq.s32.totalorder %s26, 1
      %p170 = scmp.ne.s32.totalorder %s165, %s167
      %p171 = scmp.eq.s32.totalorder %s26, 0
      %p172 = por %p170, %p171
      %p173 = scmp.ne.s32.totalorder %s165, %s167
      %p174 = scmp.eq.s32.totalorder %s31, 1
      %p175 = por %p173, %p174
      %p176 = scmp.ne.s32.totalorder %s167, %s168
      %p177 = scmp.eq.s32.totalorder %s31, 0
      %p178 = por %p176, %p177
      %p179 = scmp.ne.s32.totalorder %s167, %s168
      %p180 = scmp.eq.s32.totalorder %s32, 1
      %p181 = por %p179, %p180
      %p183 = scmp.ne.s32.totalorder %s168, %s182
      %p184 = scmp.eq.s32.totalorder %s32, 0
      %p185 = por %p183, %p184
      %s187 = sadd.s32 %s186, 1
      %p190 = scmp.eq.s32.totalorder %s26, 1
      %p191 = scmp.ne.s32.totalorder %s186, %s188
      %p192 = scmp.eq.s32.totalorder %s26, 0
      %p193 = por %p191, %p192
      %p194 = scmp.ne.s32.totalorder %s186, %s188
      %p195 = scmp.eq.s32.totalorder %s31, 1
      %p196 = por %p194, %p195
      %p197 = scmp.ne.s32.totalorder %s188, %s189
      %p198 = scmp.eq.s32.totalorder %s31, 0
      %p199 = por %p197, %p198
      %p200 = scmp.ne.s32.totalorder %s188, %s189
      %p201 = scmp.eq.s32.totalorder %s32, 1
      %p202 = por %p200, %p201
      %p204 = scmp.ne.s32.totalorder %s189, %s203
      %p205 = scmp.eq.s32.totalorder %s32, 0
      %p206 = por %p204, %p205
      %s208 = sadd.s32 %s207, 1
      %p211 = scmp.eq.s32.totalorder %s26, 1
      %p212 = scmp.ne.s32.totalorder %s207, %s209
      %p213 = scmp.eq.s32.totalorder %s26, 0
      %p214 = por %p212, %p213
      %p215 = scmp.ne.s32.totalorder %s207, %s209
      %p216 = scmp.eq.s32.totalorder %s31, 1
      %p217 = por %p215, %p216
      %p218 = scmp.ne.s32.totalorder %s209, %s210
      %p219 = scmp.eq.s32.totalorder %s31, 0
      %p220 = por %p218, %p219
      %p221 = scmp.ne.s32.totalorder %s209, %s210
      %p222 = scmp.eq.s32.totalorder %s32, 1
      %p223 = por %p221, %p222
      %p225 = scmp.ne.s32.totalorder %s210, %s224
      %p226 = scmp.eq.s32.totalorder %s32, 0
      %p227 = por %p225, %p226
      %s229 = sadd.s32 %s228, 1
      %p232 = scmp.eq.s32.totalorder %s26, 1
      %p233 = scmp.ne.s32.totalorder %s228, %s230
      %p234 = scmp.eq.s32.totalorder %s26, 0
      %p235 = por %p233, %p234
      %p236 = scmp.ne.s32.totalorder %s228, %s230
      %p237 = scmp.eq.s32.totalorder %s31, 1
      %p238 = por %p236, %p237
      %p239 = scmp.ne.s32.totalorder %s230, %s231
      %p240 = scmp.eq.s32.totalorder %s31, 0
      %p241 = por %p239, %p240
      %p242 = scmp.ne.s32.totalorder %s230, %s231
      %p243 = scmp.eq.s32.totalorder %s32, 1
      %p244 = por %p242, %p243
      %p246 = scmp.ne.s32.totalorder %s231, %s245
      %p247 = scmp.eq.s32.totalorder %s32, 0
      %p248 = por %p246, %p247
      %s250 = sadd.s32 %s249, 1
      %p253 = scmp.eq.s32.totalorder %s26, 1
      %p254 = scmp.ne.s32.totalorder %s249, %s251
      %p255 = scmp.eq.s32.totalorder %s26, 0
      %p256 = por %p254, %p255
      %p257 = scmp.ne.s32.totalorder %s249, %s251
      %p258 = scmp.eq.s32.totalorder %s31, 1
      %p259 = por %p257, %p258
      %p260 = scmp.ne.s32.totalorder %s251, %s252
      %p261 = scmp.eq.s32.totalorder %s31, 0
      %p262 = por %p260, %p261
      %p263 = scmp.ne.s32.totalorder %s251, %s252
      %p264 = scmp.eq.s32.totalorder %s32, 1
      %p265 = por %p263, %p264
      %p267 = scmp.ne.s32.totalorder %s252, %s266
      %p268 = scmp.eq.s32.totalorder %s32, 0
      %p269 = por %p267, %p268
      %s271 = sadd.s32 %s270, 1
      %p274 = scmp.eq.s32.totalorder %s26, 1
      %p275 = scmp.ne.s32.totalorder %s270, %s272
      %p276 = scmp.eq.s32.totalorder %s26, 0
      %p277 = por %p275, %p276
      %p278 = scmp.ne.s32.totalorder %s270, %s272
      %p279 = scmp.eq.s32.totalorder %s31, 1
      %p280 = por %p278, %p279
      %p281 = scmp.ne.s32.totalorder %s272, %s273
      %p282 = scmp.eq.s32.totalorder %s31, 0
      %p283 = por %p281, %p282
      %p284 = scmp.ne.s32.totalorder %s272, %s273
      %p285 = scmp.eq.s32.totalorder %s32, 1
      %p286 = por %p284, %p285
      %p288 = scmp.ne.s32.totalorder %s273, %s287
      %p289 = scmp.eq.s32.totalorder %s32, 0
      %p290 = por %p288, %p289
      %s291 = ssub.s32 %s26, %s33
      %p292 = scmp.eq.s32.totalorder %s291, 0
      %s294 = sadd.s32 %s293, 1
      %s295 = scalar_select %p292, %s293, %s294
      %p298 = pneg %p292
      %p299 = scmp.eq.s32.totalorder %s26, 1
      %p300 = por %p298, %p299
      %p301 = scmp.ne.s32.totalorder %s293, %s296
      %p302 = scmp.eq.s32.totalorder %s26, 0
      %p303 = por %p301, %p302
      %p304 = scmp.ne.s32.totalorder %s293, %s296
      %p305 = scmp.eq.s32.totalorder %s31, 1
      %p306 = por %p304, %p305
      %p307 = scmp.ne.s32.totalorder %s296, %s297
      %p308 = scmp.eq.s32.totalorder %s31, 0
      %p309 = por %p307, %p308
      %p310 = scmp.ne.s32.totalorder %s296, %s297
      %p311 = scmp.eq.s32.totalorder %s32, 1
      %p312 = por %p310, %p311
      %p314 = scmp.ne.s32.totalorder %s297, %s313
      %p315 = scmp.eq.s32.totalorder %s32, 0
      %p316 = por %p314, %p315
      %p317 = scmp.le.s32.totalorder 1, %s26
      %p318 = scmp.lt.s32.totalorder %s26, 3
      %p319 = pnand %p317, %p318
      %p320 = pneg %p319
      // Predicated region
      $region9: #{tpu_custom_call.1} parent=5 // pred_check
        _
      $region10: #{tpu_custom_call.1} parent=5 // pred_check_branch
        %322 = sbr.rel (%p319) target = $region12
      $region11: #{tpu_custom_call.1} parent=5 // pred_region
        %s323 = ssub.s32 %s26, 1
        // Predicated region
        $region13: #{tpu_custom_call.1} parent=11 // pred_check
          %p324 = pneg %p73
        $region14: #{tpu_custom_call.1} parent=11 // pred_check_branch
          %326 = sbr.rel (%p324) target = $region16
        $region15: #{tpu_custom_call.1} parent=11 // pred_region
          %s328 = ssub.s32 1024, 1024
          %329 = vsyncadd [#allocation6], %s328
          %s330 = sshll.u32 [#allocation5], 4
          %s331 = int_to_ptr.vmem [resolvable:$true] %s330
          %336 = dma.hbm_to_vmem [thread:$0]  %s1, 1024, %s331, [#allocation6], 128, 128, 8
        $region16: #{tpu_custom_call.1} parent=11 // pred_fallthru
          _
        // Predicated region
        $region17: #{tpu_custom_call.1} parent=11 // pred_check
          %p337 = pneg %p94
        $region18: #{tpu_custom_call.1} parent=11 // pred_check_branch
          %339 = sbr.rel (%p337) target = $region20
        $region19: #{tpu_custom_call.1} parent=11 // pred_region
          %s341 = ssub.s32 1024, 1024
          %342 = vsyncadd [#allocation6], %s341
          %s343 = sshll.u32 [#allocation7], 4
          %s344 = int_to_ptr.vmem [resolvable:$true] %s343
          %349 = dma.hbm_to_vmem [thread:$0]  %s2, 1024, %s344, [#allocation6], 128, 128, 8
        $region20: #{tpu_custom_call.1} parent=11 // pred_fallthru
          _
        // Predicated region
        $region21: #{tpu_custom_call.1} parent=11 // pred_check
          %p350 = pneg %p115
        $region22: #{tpu_custom_call.1} parent=11 // pred_check_branch
          %352 = sbr.rel (%p350) target = $region24
        $region23: #{tpu_custom_call.1} parent=11 // pred_region
          _
        $region24: #{tpu_custom_call.1} parent=11 // pred_fallthru
          _
        // Predicated region
        $region25: #{tpu_custom_call.1} parent=11 // pred_check
          %p353 = pneg %p136
        $region26: #{tpu_custom_call.1} parent=11 // pred_check_branch
          %355 = sbr.rel (%p353) target = $region28
        $region27: #{tpu_custom_call.1} parent=11 // pred_region
          %s357 = ssub.s32 2048, 2048
          %358 = vsyncadd [#allocation9], %s357
          %s359 = sshll.u32 [#allocation8], 4
          %s360 = int_to_ptr.vmem [resolvable:$true] %s359
          %365 = dma.hbm_to_vmem [thread:$0]  %s4, 2048, %s360, [#allocation9], 128, 128, 8
        $region28: #{tpu_custom_call.1} parent=11 // pred_fallthru
          _
        // Predicated region
        $region29: #{tpu_custom_call.1} parent=11 // pred_check
          %p366 = pneg %p157
        $region30: #{tpu_custom_call.1} parent=11 // pred_check_branch
          %368 = sbr.rel (%p366) target = $region32
        $region31: #{tpu_custom_call.1} parent=11 // pred_region
          %s370 = ssub.s32 2048, 2048
          %371 = vsyncadd [#allocation9], %s370
          %s372 = sshll.u32 [#allocation10], 4
          %s373 = int_to_ptr.vmem [resolvable:$true] %s372
          %378 = dma.hbm_to_vmem [thread:$0]  %s5, 2048, %s373, [#allocation9], 128, 128, 8
        $region32: #{tpu_custom_call.1} parent=11 // pred_fallthru
          _
        // Predicated region
        $region33: #{tpu_custom_call.1} parent=11 // pred_check
          %p379 = pneg %p178
        $region34: #{tpu_custom_call.1} parent=11 // pred_check_branch
          %381 = sbr.rel (%p379) target = $region36
        $region35: #{tpu_custom_call.1} parent=11 // pred_region
          _
        $region36: #{tpu_custom_call.1} parent=11 // pred_fallthru
          _
        // Predicated region
        $region37: #{tpu_custom_call.1} parent=11 // pred_check
          %p382 = pneg %p199
        $region38: #{tpu_custom_call.1} parent=11 // pred_check_branch
          %384 = sbr.rel (%p382) target = $region40
        $region39: #{tpu_custom_call.1} parent=11 // pred_region
          _
        $region40: #{tpu_custom_call.1} parent=11 // pred_fallthru
          _
        // Predicated region
        $region41: #{tpu_custom_call.1} parent=11 // pred_check
          %p385 = pneg %p220
        $region42: #{tpu_custom_call.1} parent=11 // pred_check_branch
          %387 = sbr.rel (%p385) target = $region44
        $region43: #{tpu_custom_call.1} parent=11 // pred_region
          _
        $region44: #{tpu_custom_call.1} parent=11 // pred_fallthru
          _
        // Predicated region
        $region45: #{tpu_custom_call.1} parent=11 // pred_check
          %p388 = pneg %p241
        $region46: #{tpu_custom_call.1} parent=11 // pred_check_branch
          %390 = sbr.rel (%p388) target = $region48
        $region47: #{tpu_custom_call.1} parent=11 // pred_region
          _
        $region48: #{tpu_custom_call.1} parent=11 // pred_fallthru
          _
        // Predicated region
        $region49: #{tpu_custom_call.1} parent=11 // pred_check
          %p391 = pneg %p262
        $region50: #{tpu_custom_call.1} parent=11 // pred_check_branch
          %393 = sbr.rel (%p391) target = $region52
        $region51: #{tpu_custom_call.1} parent=11 // pred_region
          _
        $region52: #{tpu_custom_call.1} parent=11 // pred_fallthru
          _
        // Predicated region
        $region53: #{tpu_custom_call.1} parent=11 // pred_check
          %p394 = pneg %p283
        $region54: #{tpu_custom_call.1} parent=11 // pred_check_branch
          %396 = sbr.rel (%p394) target = $region56
        $region55: #{tpu_custom_call.1} parent=11 // pred_region
          _
        $region56: #{tpu_custom_call.1} parent=11 // pred_fallthru
          _
      $region12: #{tpu_custom_call.1} parent=5 // pred_fallthru
        _
      %p397 = scmp.lt.s32.totalorder %s26, 2
      // Predicated region
      $region57: #{tpu_custom_call.1} parent=5 // pred_check
        %p398 = pneg %p397
      $region58: #{tpu_custom_call.1} parent=5 // pred_check_branch
        %400 = sbr.rel (%p398) target = $region60
      $region59: #{tpu_custom_call.1} parent=5 // pred_region
        // Predicated region
        $region61: #{tpu_custom_call.1} parent=59 // pred_check
          %p401 = pneg %p46
        $region62: #{tpu_custom_call.1} parent=59 // pred_check_branch
          %403 = sbr.rel (%p401) target = $region64
        $region63: #{tpu_custom_call.1} parent=59 // pred_region
          %s404 = sand.u32 %s36, 1
          %s405 = scalar_lea.sflag [#allocation3], %s404
          %s406 = sand.u32 %s36, 1
          %s407 = smul.addr %s406, 32
          %s408 = scalar_lea.vmem [#allocation2], %s407
          %s409 = smul.u32 8, %s26
          %s411 = ssub.s32 512, 512
          %412 = vsyncadd %s405, %s411
          %s413 = smul.addr %s409, 64
          %s414 = scalar_lea.hbm %s0, %s413
          %s415 = sshll.u32 %s408, 4
          %s416 = int_to_ptr.vmem [resolvable:$true] %s415
          %421 = dma.hbm_to_vmem [thread:$0]  %s414, 512, %s416, %s405, 64, 64, 4
        $region64: #{tpu_custom_call.1} parent=59 // pred_fallthru
          _
      $region60: #{tpu_custom_call.1} parent=5 // pred_fallthru
        _
      %p422 = scmp.le.s32.totalorder 1, %s26
      %p423 = scmp.lt.s32.totalorder %s26, 3
      %p424 = pnand %p422, %p423
      %p425 = pneg %p424
      // Predicated region
      $region65: #{tpu_custom_call.1} parent=5 // pred_check
        _
      $region66: #{tpu_custom_call.1} parent=5 // pred_check_branch
        %427 = sbr.rel (%p424) target = $region68
      $region67: #{tpu_custom_call.1} parent=5 // pred_region
        %s428 = ssub.s32 %s26, 1
        %s429 = sand.u32 %s39, 1
        %s430 = scalar_lea.sflag [#allocation3], %s429
        %s431 = sand.u32 %s39, 1
        %s432 = smul.addr %s431, 32
        %s433 = scalar_lea.vmem [#allocation2], %s432
        // Predicated region
        $region69: #{tpu_custom_call.1} parent=67 // pred_check
          %p434 = pneg %p52
        $region70: #{tpu_custom_call.1} parent=67 // pred_check_branch
          %436 = sbr.rel (%p434) target = $region72
        $region71: #{tpu_custom_call.1} parent=67 // pred_region
          %437 = dma.done %s430, 512
        $region72: #{tpu_custom_call.1} parent=67 // pred_fallthru
          _
        // Predicated region
        $region73: #{tpu_custom_call.1} parent=67 // pred_check
          %p438 = pneg %p73
        $region74: #{tpu_custom_call.1} parent=67 // pred_check_branch
          %440 = sbr.rel (%p438) target = $region76
        $region75: #{tpu_custom_call.1} parent=67 // pred_region
          %441 = dma.done [#allocation6], 1024
        $region76: #{tpu_custom_call.1} parent=67 // pred_fallthru
          _
        // Predicated region
        $region77: #{tpu_custom_call.1} parent=67 // pred_check
          %p442 = pneg %p94
        $region78: #{tpu_custom_call.1} parent=67 // pred_check_branch
          %444 = sbr.rel (%p442) target = $region80
        $region79: #{tpu_custom_call.1} parent=67 // pred_region
          %445 = dma.done [#allocation6], 1024
        $region80: #{tpu_custom_call.1} parent=67 // pred_fallthru
          _
        // Predicated region
        $region81: #{tpu_custom_call.1} parent=67 // pred_check
          %p446 = pneg %p136
        $region82: #{tpu_custom_call.1} parent=67 // pred_check_branch
          %448 = sbr.rel (%p446) target = $region84
        $region83: #{tpu_custom_call.1} parent=67 // pred_region
          %449 = dma.done [#allocation9], 2048
        $region84: #{tpu_custom_call.1} parent=67 // pred_fallthru
          _
        // Predicated region
        $region85: #{tpu_custom_call.1} parent=67 // pred_check
          %p450 = pneg %p157
        $region86: #{tpu_custom_call.1} parent=67 // pred_check_branch
          %452 = sbr.rel (%p450) target = $region88
        $region87: #{tpu_custom_call.1} parent=67 // pred_region
          %453 = dma.done [#allocation9], 2048
        $region88: #{tpu_custom_call.1} parent=67 // pred_fallthru
          _
        %s454 = sand.u32 %s39, 1
        %s455 = scalar_lea.sflag [#allocation3], %s454
        %s456 = sand.u32 %s39, 1
        %s457 = smul.addr %s456, 32
        %s458 = scalar_lea.vmem [#allocation2], %s457
        %p459 = pneg %p52
        %p460 = pneg %p49
        %p461 = pneg %p73
        %p462 = pneg %p70
        %p463 = pneg %p94
        %p464 = pneg %p91
        %p465 = pneg %p115
        %p466 = pneg %p112
        %p467 = pneg %p136
        %p468 = pneg %p133
        %p469 = pneg %p157
        %p470 = pneg %p154
        %p471 = pneg %p178
        %p472 = pneg %p175
        %p473 = pneg %p199
        %p474 = pneg %p196
        %p475 = pneg %p220
        %p476 = pneg %p217
        %p477 = pneg %p241
        %p478 = pneg %p238
        %p479 = pneg %p262
        %p480 = pneg %p259
        %p481 = pneg %p283
        %p482 = pneg %p280
        %p483 = pneg %p309
        %p484 = pneg %p306
        %s485 = sand.u32 %s296, 1
        %s486 = scalar_lea.sflag [#allocation4], %s485
        %s487 = sand.u32 %s296, 1
        %s488 = smul.addr %s487, 8
        %s489 = scalar_lea.vmem [#allocation11], %s488
        %s490 = smul.u32 8, %s31
        %v491 = vld [vmem:[%s433] sm:$0xf]
        %v492 = vld [vmem:[%s433 + $0x4] sm:$0xf]
        %v493 = vld [vmem:[%s433 + $0x8] sm:$0xf]
        %v494 = vld [vmem:[%s433 + $0xc] sm:$0xf]
        %v495 = vld [vmem:[%s433 + $0x10] sm:$0xf]
        %v496 = vld [vmem:[%s433 + $0x14] sm:$0xf]
        %v497 = vld [vmem:[%s433 + $0x18] sm:$0xf]
        %v498 = vld [vmem:[%s433 + $0x1c] sm:$0xf]
        %v499 = vld [vmem:[#allocation5] sm:$0xff]
        %v500 = vld [vmem:[#allocation5 + $0x8] sm:$0xff]
        %v501 = vld [vmem:[#allocation5 + $0x10] sm:$0xff]
        %v502 = vld [vmem:[#allocation5 + $0x18] sm:$0xff]
        %v503 = vld [vmem:[#allocation5 + $0x20] sm:$0xff]
        %v504 = vld [vmem:[#allocation5 + $0x28] sm:$0xff]
        %v505 = vld [vmem:[#allocation5 + $0x30] sm:$0xff]
        %v506 = vld [vmem:[#allocation5 + $0x38] sm:$0xff]
        %v515 = vcombine.low %v491, %v492
        %v516 = vcombine.low %v493, %v494
        %v517 = vcombine.low %v495, %v496
        %v518 = vcombine.low %v497, %v498
        %vm519 = vcmask 523264
        %v520 = vsel %vm519, %v515, 0
        %v522 = vsel %vm519, %v516, 0
        %v524 = vsel %vm519, %v517, 0
        %v526 = vsel %vm519, %v518, 0
        %528 = vmatprep.subr.mxu0 0.0
        %529 = vmatpush1.msra.mxu0 %v499
        %530 = vmatprep.subr.mxu0 0.0
        %531 = vmatpush1.msra.mxu0 %v500
        %532 = vmatprep.subr.mxu0 0.0
        %533 = vmatpush1.msra.mxu0 %v501
        %534 = vmatprep.subr.mxu0 0.0
        %535 = vmatpush1.msra.mxu0 %v502
        %536 = vmatprep.subr.mxu0 0.0
        %537 = vmatpush1.msra.mxu0 %v503
        %538 = vmatprep.subr.mxu0 0.0
        %539 = vmatpush1.msra.mxu0 %v504
        %540 = vmatprep.subr.mxu0 0.0
        %541 = vmatpush1.msra.mxu0 %v505
        %542 = vmatprep.subr.mxu0 0.0
        %543 = vmatpush1.msra.mxu0 %v506
        %544 = vmatprep.subr.mxu0 0.0
        %545 = vmatpush1.msra.mxu0 0.0
        %546 = vmatprep.subr.mxu0 0.0
        %547 = vmatpush1.msra.mxu0 0.0
        %548 = vmatprep.subr.mxu0 0.0
        %549 = vmatpush1.msra.mxu0 0.0
        %550 = vmatprep.subr.mxu0 0.0
        %551 = vmatpush1.msra.mxu0 0.0
        %552 = vmatprep.subr.mxu0 0.0
        %553 = vmatpush1.msra.mxu0 0.0
        %554 = vmatprep.subr.mxu0 0.0
        %555 = vmatpush1.msra.mxu0 0.0
        %556 = vmatprep.subr.mxu0 0.0
        %557 = vmatpush1.msra.mxu0 0.0
        %558 = vmatprep.subr.mxu0 0.0
        %559 = vmatpush1.msra.mxu0 0.0
        %560 = vmatprep.subr.mxu0 0.0
        %561 = vmatpush1.msra.mxu0 0.0
        %562 = vmatprep.subr.mxu0 0.0
        %563 = vmatpush1.msra.mxu0 0.0
        %564 = vmatprep.subr.mxu0 0.0
        %565 = vmatpush1.msra.mxu0 0.0
        %566 = vmatprep.subr.mxu0 0.0
        %567 = vmatpush1.msra.mxu0 0.0
        %568 = vmatprep.subr.mxu0 0.0
        %569 = vmatpush1.msra.mxu0 0.0
        %570 = vmatprep.subr.mxu0 0.0
        %571 = vmatpush1.msra.mxu0 0.0
        %572 = vmatprep.subr.mxu0 0.0
        %573 = vmatpush1.msra.mxu0 0.0
        %574 = vmatprep.subr.mxu0 0.0
        %575 = vmatpush1.msra.mxu0 0.0
        %576 = vmatprep.subr.mxu0 0.0
        %577 = vmatpush1.msra.mxu0 0.0
        %578 = vmatprep.subr.mxu0 0.0
        %579 = vmatpush1.msra.mxu0 0.0
        %580 = vmatprep.subr.mxu0 0.0
        %581 = vmatpush1.msra.mxu0 0.0
        %582 = vmatprep.subr.mxu0 0.0
        %583 = vmatpush1.msra.mxu0 0.0
        %584 = vmatprep.subr.mxu0 0.0
        %585 = vmatpush1.msra.mxu0 0.0
        %586 = vmatprep.subr.mxu0 0.0
        %587 = vmatpush1.msra.mxu0 0.0
        %588 = vmatprep.subr.mxu0 0.0
        %589 = vmatpush1.msra.mxu0 0.0
        %590 = vmatprep.subr.mxu0 0.0
        %591 = vmatpush1.msra.mxu0 0.0
        %592 = vmatprep.mubr.f32.mxu0 0.0
        %593 = vmatmul.mubr.f32.gmra.mrb[0].mxu0 %v520
        %v594 = vpop.f32.mrb[0].mxu0
        %v595 = vadd.f32 0.0, %v594
        %v596 = vpop.f32.mrb[0].mxu0
        %597 = vmatprep.mubr.f32.mxu0 0.0
        %598 = vmatmul.mubr.f32.gmra.mrb[0].mxu0 %v522
        %v599 = vpop.f32.mrb[0].mxu0
        %v600 = vadd.f32 0.0, %v599
        %v601 = vpop.f32.mrb[0].mxu0
        %602 = vmatprep.mubr.f32.mxu0 0.0
        %603 = vmatmul.mubr.f32.gmra.mrb[0].mxu0 %v524
        %v604 = vpop.f32.mrb[0].mxu0
        %v605 = vadd.f32 0.0, %v604
        %v606 = vpop.f32.mrb[0].mxu0
        %607 = vmatprep.mubr.f32.mxu0 0.0
        %608 = vmatmul.mubr.f32.gmra.mrb[0].mxu0 %v526
        %v609 = vpop.f32.mrb[0].mxu0
        %v610 = vadd.f32 0.0, %v609
        %v611 = vpop.f32.mrb[0].mxu0
        %612 = vdwg.mxu0
        %v613 = vmax.f32 %v595, 0.0
        %v614 = vmax.f32 %v600, 0.0
        %v615 = vmax.f32 %v605, 0.0
        %v616 = vmax.f32 %v610, 0.0
        %v617 = vld [vmem:[#allocation7] sm:$0xff]
        %v618 = vld [vmem:[#allocation7 + $0x8] sm:$0xff]
        %v619 = vld [vmem:[#allocation7 + $0x10] sm:$0xff]
        %v620 = vld [vmem:[#allocation7 + $0x18] sm:$0xff]
        %v621 = vld [vmem:[#allocation7 + $0x20] sm:$0xff]
        %v622 = vld [vmem:[#allocation7 + $0x28] sm:$0xff]
        %v623 = vld [vmem:[#allocation7 + $0x30] sm:$0xff]
        %v624 = vld [vmem:[#allocation7 + $0x38] sm:$0xff]
        %625 = vmatprep.subr.mxu0 0.0
        %626 = vmatpush1.msra.mxu0 %v617
        %627 = vmatprep.subr.mxu0 0.0
        %628 = vmatpush1.msra.mxu0 %v618
        %629 = vmatprep.subr.mxu0 0.0
        %630 = vmatpush1.msra.mxu0 %v619
        %631 = vmatprep.subr.mxu0 0.0
        %632 = vmatpush1.msra.mxu0 %v620
        %633 = vmatprep.subr.mxu0 0.0
        %634 = vmatpush1.msra.mxu0 %v621
        %635 = vmatprep.subr.mxu0 0.0
        %636 = vmatpush1.msra.mxu0 %v622
        %637 = vmatprep.subr.mxu0 0.0
        %638 = vmatpush1.msra.mxu0 %v623
        %639 = vmatprep.subr.mxu0 0.0
        %640 = vmatpush1.msra.mxu0 %v624
        %641 = vmatprep.subr.mxu0 0.0
        %642 = vmatpush1.msra.mxu0 0.0
        %643 = vmatprep.subr.mxu0 0.0
        %644 = vmatpush1.msra.mxu0 0.0
        %645 = vmatprep.subr.mxu0 0.0
        %646 = vmatpush1.msra.mxu0 0.0
        %647 = vmatprep.subr.mxu0 0.0
        %648 = vmatpush1.msra.mxu0 0.0
        %649 = vmatprep.subr.mxu0 0.0
        %650 = vmatpush1.msra.mxu0 0.0
        %651 = vmatprep.subr.mxu0 0.0
        %652 = vmatpush1.msra.mxu0 0.0
        %653 = vmatprep.subr.mxu0 0.0
        %654 = vmatpush1.msra.mxu0 0.0
        %655 = vmatprep.subr.mxu0 0.0
        %656 = vmatpush1.msra.mxu0 0.0
        %657 = vmatprep.subr.mxu0 0.0
        %658 = vmatpush1.msra.mxu0 0.0
        %659 = vmatprep.subr.mxu0 0.0
        %660 = vmatpush1.msra.mxu0 0.0
        %661 = vmatprep.subr.mxu0 0.0
        %662 = vmatpush1.msra.mxu0 0.0
        %663 = vmatprep.subr.mxu0 0.0
        %664 = vmatpush1.msra.mxu0 0.0
        %665 = vmatprep.subr.mxu0 0.0
        %666 = vmatpush1.msra.mxu0 0.0
        %667 = vmatprep.subr.mxu0 0.0
        %668 = vmatpush1.msra.mxu0 0.0
        %669 = vmatprep.subr.mxu0 0.0
        %670 = vmatpush1.msra.mxu0 0.0
        %671 = vmatprep.subr.mxu0 0.0
        %672 = vmatpush1.msra.mxu0 0.0
        %673 = vmatprep.subr.mxu0 0.0
        %674 = vmatpush1.msra.mxu0 0.0
        %675 = vmatprep.subr.mxu0 0.0
        %676 = vmatpush1.msra.mxu0 0.0
        %677 = vmatprep.subr.mxu0 0.0
        %678 = vmatpush1.msra.mxu0 0.0
        %679 = vmatprep.subr.mxu0 0.0
        %680 = vmatpush1.msra.mxu0 0.0
        %681 = vmatprep.subr.mxu0 0.0
        %682 = vmatpush1.msra.mxu0 0.0
        %683 = vmatprep.subr.mxu0 0.0
        %684 = vmatpush1.msra.mxu0 0.0
        %685 = vmatprep.subr.mxu0 0.0
        %686 = vmatpush1.msra.mxu0 0.0
        %687 = vmatprep.subr.mxu0 0.0
        %688 = vmatpush1.msra.mxu0 0.0
        %689 = vmatprep.mubr.f32.mxu0 0.0
        %690 = vmatmul.mubr.f32.gmra.mrb[0].mxu0 %v520
        %v691 = vpop.f32.mrb[0].mxu0
        %v692 = vadd.f32 0.0, %v691
        %v693 = vpop.f32.mrb[0].mxu0
        %694 = vmatprep.mubr.f32.mxu0 0.0
        %695 = vmatmul.mubr.f32.gmra.mrb[0].mxu0 %v522
        %v696 = vpop.f32.mrb[0].mxu0
        %v697 = vadd.f32 0.0, %v696
        %v698 = vpop.f32.mrb[0].mxu0
        %699 = vmatprep.mubr.f32.mxu0 0.0
        %700 = vmatmul.mubr.f32.gmra.mrb[0].mxu0 %v524
        %v701 = vpop.f32.mrb[0].mxu0
        %v702 = vadd.f32 0.0, %v701
        %v703 = vpop.f32.mrb[0].mxu0
        %704 = vmatprep.mubr.f32.mxu0 0.0
        %705 = vmatmul.mubr.f32.gmra.mrb[0].mxu0 %v526
        %v706 = vpop.f32.mrb[0].mxu0
        %v707 = vadd.f32 0.0, %v706
        %v708 = vpop.f32.mrb[0].mxu0
        %709 = vdwg.mxu0
        %v714 = vcombine.high %v613, %v613
        %v715 = vcombine.high %v614, %v614
        %v716 = vcombine.high %v615, %v615
        %v717 = vcombine.high %v616, %v616
        %vm722 = vcmask 1043456
        %v723 = vsel %vm722, %v613, -inf
        %v724 = vrot.slane %v723, 4
        %v725 = vmax.f32 %v723, %v724
        %v726 = vrot.slane %v725, 2
        %v727 = vmax.f32 %v725, %v726
        %v728 = vrot.slane %v727, 1
        %v729 = vmax.f32 %v727, %v728
        %v730 = vsel %vm722, %v714, -inf
        %v731 = vrot.slane %v730, 4
        %v732 = vmax.f32 %v730, %v731
        %v733 = vrot.slane %v732, 2
        %v734 = vmax.f32 %v732, %v733
        %v735 = vrot.slane %v734, 1
        %v736 = vmax.f32 %v734, %v735
        %v737 = vsel %vm722, %v614, -inf
        %v738 = vrot.slane %v737, 4
        %v739 = vmax.f32 %v737, %v738
        %v740 = vrot.slane %v739, 2
        %v741 = vmax.f32 %v739, %v740
        %v742 = vrot.slane %v741, 1
        %v743 = vmax.f32 %v741, %v742
        %v744 = vsel %vm722, %v715, -inf
        %v745 = vrot.slane %v744, 4
        %v746 = vmax.f32 %v744, %v745
        %v747 = vrot.slane %v746, 2
        %v748 = vmax.f32 %v746, %v747
        %v749 = vrot.slane %v748, 1
        %v750 = vmax.f32 %v748, %v749
        %v751 = vsel %vm722, %v615, -inf
        %v752 = vrot.slane %v751, 4
        %v753 = vmax.f32 %v751, %v752
        %v754 = vrot.slane %v753, 2
        %v755 = vmax.f32 %v753, %v754
        %v756 = vrot.slane %v755, 1
        %v757 = vmax.f32 %v755, %v756
        %v758 = vsel %vm722, %v716, -inf
        %v759 = vrot.slane %v758, 4
        %v760 = vmax.f32 %v758, %v759
        %v761 = vrot.slane %v760, 2
        %v762 = vmax.f32 %v760, %v761
        %v763 = vrot.slane %v762, 1
        %v764 = vmax.f32 %v762, %v763
        %v765 = vsel %vm722, %v616, -inf
        %v766 = vrot.slane %v765, 4
        %v767 = vmax.f32 %v765, %v766
        %v768 = vrot.slane %v767, 2
        %v769 = vmax.f32 %v767, %v768
        %v770 = vrot.slane %v769, 1
        %v771 = vmax.f32 %v769, %v770
        %v772 = vsel %vm722, %v717, -inf
        %v773 = vrot.slane %v772, 4
        %v774 = vmax.f32 %v772, %v773
        %v775 = vrot.slane %v774, 2
        %v776 = vmax.f32 %v774, %v775
        %v777 = vrot.slane %v776, 1
        %v778 = vmax.f32 %v776, %v777
        %vm787 = vcmask 1041409
        %v788 = vsel %vm787, %v736, %v729
        %vm789 = vcmask 1042434
        %v790 = vsel %vm789, %v743, %v788
        %vm791 = vcmask 1043459
        %v792 = vsel %vm791, %v750, %v790
        %vm793 = vcmask 1044484
        %v794 = vsel %vm793, %v757, %v792
        %vm795 = vcmask 1045509
        %v796 = vsel %vm795, %v764, %v794
        %vm797 = vcmask 1046534
        %v798 = vsel %vm797, %v771, %v796
        %vm799 = vcmask 1047559
        %v800 = vsel %vm799, %v778, %v798
        %802 = vrot.lane.b32.xlu0 %v800, 64
        %v803 = vpop.permute.xlu0 %802
        %v805 = vrot.slane %v803, 1
        %v806 = vrot.slane %v803, 2
        %v807 = vrot.slane %v803, 3
        %v808 = vrot.slane %v803, 4
        %v809 = vrot.slane %v803, 5
        %v810 = vrot.slane %v803, 6
        %v811 = vrot.slane %v803, 7
        %v820 = vmax.f32 %v729, %v803
        %v821 = vmax.f32 %v736, %v805
        %v822 = vmax.f32 %v743, %v806
        %v823 = vmax.f32 %v750, %v807
        %v824 = vmax.f32 %v757, %v808
        %v825 = vmax.f32 %v764, %v809
        %v826 = vmax.f32 %v771, %v810
        %v827 = vmax.f32 %v778, %v811
        %v836 = vrot.slane %v821, 7
        %v837 = vsel %vm787, %v836, %v820
        %v838 = vrot.slane %v822, 6
        %v839 = vsel %vm789, %v838, %v837
        %v840 = vrot.slane %v823, 5
        %v841 = vsel %vm791, %v840, %v839
        %v842 = vrot.slane %v824, 4
        %v843 = vsel %vm793, %v842, %v841
        %v844 = vrot.slane %v825, 3
        %v845 = vsel %vm795, %v844, %v843
        %v846 = vrot.slane %v826, 2
        %v847 = vsel %vm797, %v846, %v845
        %v848 = vrot.slane %v827, 1
        %v849 = vsel %vm799, %v848, %v847
        %851 = vrot.lane.b32.xlu0 %v849, 32
        %v852 = vpop.permute.xlu0 %851
        %v854 = vrot.slane %v852, 1
        %v855 = vrot.slane %v852, 2
        %v856 = vrot.slane %v852, 3
        %v857 = vrot.slane %v852, 4
        %v858 = vrot.slane %v852, 5
        %v859 = vrot.slane %v852, 6
        %v860 = vrot.slane %v852, 7
        %v869 = vmax.f32 %v820, %v852
        %v870 = vmax.f32 %v821, %v854
        %v871 = vmax.f32 %v822, %v855
        %v872 = vmax.f32 %v823, %v856
        %v873 = vmax.f32 %v824, %v857
        %v874 = vmax.f32 %v825, %v858
        %v875 = vmax.f32 %v826, %v859
        %v876 = vmax.f32 %v827, %v860
        %v877 = vld [vmem:[%s3] sm:$0xff]
        %v878 = vld [vmem:[%s3 + $0x8] sm:$0xff]
        %v879 = vld [vmem:[%s3 + $0x10] sm:$0xff]
        %v880 = vld [vmem:[%s3 + $0x18] sm:$0xff]
        %v881 = vld [vmem:[%s3 + $0x20] sm:$0xff]
        %v882 = vld [vmem:[%s3 + $0x28] sm:$0xff]
        %v883 = vld [vmem:[%s3 + $0x30] sm:$0xff]
        %v884 = vld [vmem:[%s3 + $0x38] sm:$0xff]
        %v885 = vld [vmem:[%s3 + $0x40] sm:$0xff]
        %v886 = vld [vmem:[%s3 + $0x48] sm:$0xff]
        %v887 = vld [vmem:[%s3 + $0x50] sm:$0xff]
        %v888 = vld [vmem:[%s3 + $0x58] sm:$0xff]
        %v889 = vld [vmem:[%s3 + $0x60] sm:$0xff]
        %v890 = vld [vmem:[%s3 + $0x68] sm:$0xff]
        %v891 = vld [vmem:[%s3 + $0x70] sm:$0xff]
        %v892 = vld [vmem:[%s3 + $0x78] sm:$0xff]
        %893 = vmatprep.subr.mxu0 0.0
        %894 = vmatpush1.msra.mxu0 %v877
        %895 = vmatprep.subr.mxu0 0.0
        %896 = vmatpush1.msra.mxu0 %v878
        %897 = vmatprep.subr.mxu0 0.0
        %898 = vmatpush1.msra.mxu0 %v879
        %899 = vmatprep.subr.mxu0 0.0
        %900 = vmatpush1.msra.mxu0 %v880
        %901 = vmatprep.subr.mxu0 0.0
        %902 = vmatpush1.msra.mxu0 %v881
        %903 = vmatprep.subr.mxu0 0.0
        %904 = vmatpush1.msra.mxu0 %v882
        %905 = vmatprep.subr.mxu0 0.0
        %906 = vmatpush1.msra.mxu0 %v883
        %907 = vmatprep.subr.mxu0 0.0
        %908 = vmatpush1.msra.mxu0 %v884
        %909 = vmatprep.subr.mxu0 0.0
        %910 = vmatpush1.msra.mxu0 %v885
        %911 = vmatprep.subr.mxu0 0.0
        %912 = vmatpush1.msra.mxu0 %v886
        %913 = vmatprep.subr.mxu0 0.0
        %914 = vmatpush1.msra.mxu0 %v887
        %915 = vmatprep.subr.mxu0 0.0
        %916 = vmatpush1.msra.mxu0 %v888
        %917 = vmatprep.subr.mxu0 0.0
        %918 = vmatpush1.msra.mxu0 %v889
        %919 = vmatprep.subr.mxu0 0.0
        %920 = vmatpush1.msra.mxu0 %v890
        %921 = vmatprep.subr.mxu0 0.0
        %922 = vmatpush1.msra.mxu0 %v891
        %923 = vmatprep.subr.mxu0 0.0
        %924 = vmatpush1.msra.mxu0 %v892
        %925 = vmatprep.subr.mxu0 0.0
        %926 = vmatpush1.msra.mxu0 0.0
        %927 = vmatprep.subr.mxu0 0.0
        %928 = vmatpush1.msra.mxu0 0.0
        %929 = vmatprep.subr.mxu0 0.0
        %930 = vmatpush1.msra.mxu0 0.0
        %931 = vmatprep.subr.mxu0 0.0
        %932 = vmatpush1.msra.mxu0 0.0
        %933 = vmatprep.subr.mxu0 0.0
        %934 = vmatpush1.msra.mxu0 0.0
        %935 = vmatprep.subr.mxu0 0.0
        %936 = vmatpush1.msra.mxu0 0.0
        %937 = vmatprep.subr.mxu0 0.0
        %938 = vmatpush1.msra.mxu0 0.0
        %939 = vmatprep.subr.mxu0 0.0
        %940 = vmatpush1.msra.mxu0 0.0
        %941 = vmatprep.subr.mxu0 0.0
        %942 = vmatpush1.msra.mxu0 0.0
        %943 = vmatprep.subr.mxu0 0.0
        %944 = vmatpush1.msra.mxu0 0.0
        %945 = vmatprep.subr.mxu0 0.0
        %946 = vmatpush1.msra.mxu0 0.0
        %947 = vmatprep.subr.mxu0 0.0
        %948 = vmatpush1.msra.mxu0 0.0
        %949 = vmatprep.subr.mxu0 0.0
        %950 = vmatpush1.msra.mxu0 0.0
        %951 = vmatprep.subr.mxu0 0.0
        %952 = vmatpush1.msra.mxu0 0.0
        %953 = vmatprep.subr.mxu0 0.0
        %954 = vmatpush1.msra.mxu0 0.0
        %955 = vmatprep.subr.mxu0 0.0
        %956 = vmatpush1.msra.mxu0 0.0
        %957 = vmatprep.mubr.f32.mxu0 0.0
        %958 = vmatmul.mubr.f32.gmra.mrb[0].mxu0 %v613
        %v959 = vpop.f32.mrb[0].mxu0
        %v960 = vadd.f32 0.0, %v959
        %v961 = vpop.f32.mrb[0].mxu0
        %962 = vmatprep.mubr.f32.mxu0 0.0
        %963 = vmatmul.mubr.f32.gmra.mrb[0].mxu0 %v614
        %v964 = vpop.f32.mrb[0].mxu0
        %v965 = vadd.f32 0.0, %v964
        %v966 = vpop.f32.mrb[0].mxu0
        %967 = vmatprep.mubr.f32.mxu0 0.0
        %968 = vmatmul.mubr.f32.gmra.mrb[0].mxu0 %v615
        %v969 = vpop.f32.mrb[0].mxu0
        %v970 = vadd.f32 0.0, %v969
        %v971 = vpop.f32.mrb[0].mxu0
        %972 = vmatprep.mubr.f32.mxu0 0.0
        %973 = vmatmul.mubr.f32.gmra.mrb[0].mxu0 %v616
        %v974 = vpop.f32.mrb[0].mxu0
        %v975 = vadd.f32 0.0, %v974
        %v976 = vpop.f32.mrb[0].mxu0
        %977 = vdwg.mxu0
        %v978 = vld [vmem:[#allocation8] sm:$0xff]
        %v979 = vld [vmem:[#allocation8 + $0x8] sm:$0xff]
        %v980 = vld [vmem:[#allocation8 + $0x10] sm:$0xff]
        %v981 = vld [vmem:[#allocation8 + $0x18] sm:$0xff]
        %v982 = vld [vmem:[#allocation8 + $0x20] sm:$0xff]
        %v983 = vld [vmem:[#allocation8 + $0x28] sm:$0xff]
        %v984 = vld [vmem:[#allocation8 + $0x30] sm:$0xff]
        %v985 = vld [vmem:[#allocation8 + $0x38] sm:$0xff]
        %v986 = vld [vmem:[#allocation8 + $0x40] sm:$0xff]
        %v987 = vld [vmem:[#allocation8 + $0x48] sm:$0xff]
        %v988 = vld [vmem:[#allocation8 + $0x50] sm:$0xff]
        %v989 = vld [vmem:[#allocation8 + $0x58] sm:$0xff]
        %v990 = vld [vmem:[#allocation8 + $0x60] sm:$0xff]
        %v991 = vld [vmem:[#allocation8 + $0x68] sm:$0xff]
        %v992 = vld [vmem:[#allocation8 + $0x70] sm:$0xff]
        %v993 = vld [vmem:[#allocation8 + $0x78] sm:$0xff]
        %v994 = vld [vmem:[%s8] sm:$0x1]
        %v996 = vlaneseq
        %v997 = vshrl.u32 %v996, 7
        %v998 = vsub.s32 0, %v997
        %v999 = vrot.slane %v994, %v998
        %v1009 = vrot.slane %v870, 7
        %v1010 = vsel %vm787, %v1009, %v869
        %v1011 = vrot.slane %v871, 6
        %v1012 = vsel %vm789, %v1011, %v1010
        %v1013 = vrot.slane %v872, 5
        %v1014 = vsel %vm791, %v1013, %v1012
        %v1015 = vrot.slane %v873, 4
        %v1016 = vsel %vm793, %v1015, %v1014
        %v1017 = vrot.slane %v874, 3
        %v1018 = vsel %vm795, %v1017, %v1016
        %v1019 = vrot.slane %v875, 2
        %v1020 = vsel %vm797, %v1019, %v1018
        %v1021 = vrot.slane %v876, 1
        %v1022 = vsel %vm799, %v1021, %v1020
        %1024 = vmatprep.subr.mxu0 0.0
        %1025 = vmatpush1.msra.mxu0 %v978
        %1026 = vmatprep.subr.mxu0 0.0
        %1027 = vmatpush1.msra.mxu0 %v979
        %1028 = vmatprep.subr.mxu0 0.0
        %1029 = vmatpush1.msra.mxu0 %v980
        %1030 = vmatprep.subr.mxu0 0.0
        %1031 = vmatpush1.msra.mxu0 %v981
        %1032 = vmatprep.subr.mxu0 0.0
        %1033 = vmatpush1.msra.mxu0 %v982
        %1034 = vmatprep.subr.mxu0 0.0
        %1035 = vmatpush1.msra.mxu0 %v983
        %1036 = vmatprep.subr.mxu0 0.0
        %1037 = vmatpush1.msra.mxu0 %v984
        %1038 = vmatprep.subr.mxu0 0.0
        %1039 = vmatpush1.msra.mxu0 %v985
        %1040 = vmatprep.subr.mxu0 0.0
        %1041 = vmatpush1.msra.mxu0 %v986
        %1042 = vmatprep.subr.mxu0 0.0
        %1043 = vmatpush1.msra.mxu0 %v987
        %1044 = vmatprep.subr.mxu0 0.0
        %1045 = vmatpush1.msra.mxu0 %v988
        %1046 = vmatprep.subr.mxu0 0.0
        %1047 = vmatpush1.msra.mxu0 %v989
        %1048 = vmatprep.subr.mxu0 0.0
        %1049 = vmatpush1.msra.mxu0 %v990
        %1050 = vmatprep.subr.mxu0 0.0
        %1051 = vmatpush1.msra.mxu0 %v991
        %1052 = vmatprep.subr.mxu0 0.0
        %1053 = vmatpush1.msra.mxu0 %v992
        %1054 = vmatprep.subr.mxu0 0.0
        %1055 = vmatpush1.msra.mxu0 %v993
        %1056 = vmatprep.subr.mxu0 0.0
        %1057 = vmatpush1.msra.mxu0 0.0
        %1058 = vmatprep.subr.mxu0 0.0
        %1059 = vmatpush1.msra.mxu0 0.0
        %1060 = vmatprep.subr.mxu0 0.0
        %1061 = vmatpush1.msra.mxu0 0.0
        %1062 = vmatprep.subr.mxu0 0.0
        %1063 = vmatpush1.msra.mxu0 0.0
        %1064 = vmatprep.subr.mxu0 0.0
        %1065 = vmatpush1.msra.mxu0 0.0
        %1066 = vmatprep.subr.mxu0 0.0
        %1067 = vmatpush1.msra.mxu0 0.0
        %1068 = vmatprep.subr.mxu0 0.0
        %1069 = vmatpush1.msra.mxu0 0.0
        %1070 = vmatprep.subr.mxu0 0.0
        %1071 = vmatpush1.msra.mxu0 0.0
        %1072 = vmatprep.subr.mxu0 0.0
        %1073 = vmatpush1.msra.mxu0 0.0
        %1074 = vmatprep.subr.mxu0 0.0
        %1075 = vmatpush1.msra.mxu0 0.0
        %1076 = vmatprep.subr.mxu0 0.0
        %1077 = vmatpush1.msra.mxu0 0.0
        %1078 = vmatprep.subr.mxu0 0.0
        %1079 = vmatpush1.msra.mxu0 0.0
        %1080 = vmatprep.subr.mxu0 0.0
        %1081 = vmatpush1.msra.mxu0 0.0
        %1082 = vmatprep.subr.mxu0 0.0
        %1083 = vmatpush1.msra.mxu0 0.0
        %1084 = vmatprep.subr.mxu0 0.0
        %1085 = vmatpush1.msra.mxu0 0.0
        %1086 = vmatprep.subr.mxu0 0.0
        %1087 = vmatpush1.msra.mxu0 0.0
        %1088 = vmatprep.mubr.f32.mxu0 0.0
        %1089 = vmatmul.mubr.f32.gmra.mrb[0].mxu0 %v1022
        %v1090 = vpop.f32.mrb[0].mxu0
        %v1091 = vadd.f32 %v999, %v1090
        %v1092 = vpop.f32.mrb[0].mxu0
        %1093 = vdwg.mxu0
        %v1098 = vcombine.high %v960, %v960
        %v1099 = vcombine.high %v965, %v965
        %v1100 = vcombine.high %v970, %v970
        %v1101 = vcombine.high %v975, %v975
        %v1107 = vcombine.high %v1091, %v1091
        %v1109 = vunpack.c.l.s4 1966171168
        %v1110 = vunpack.c.0.s8 %v1109
        %v1111 = vlaneseq
        %v1112 = vshrl.u32 %v1111, 7
        %v1113 = vsub.s32 %v1110, %v1112
        %v1114 = vrot.slane %v1091, %v1113
        %v1116 = vunpack.c.l.s4 1966171168
        %v1117 = vunpack.c.0.s8 %v1116
        %v1118 = vlaneseq
        %v1119 = vshrl.u32 %v1118, 7
        %v1120 = vsub.s32 %v1117, %v1119
        %v1121 = vrot.slane %v1107, %v1120
        %v1122 = vcombine.high %v1114, %v1114
        %v1123 = vcombine.high %v1121, %v1121
        %v1125 = vunpack.c.l.s4 1966171168
        %v1126 = vunpack.c.0.s8 %v1125
        %v1127 = vlaneseq
        %v1128 = vshrl.u32 %v1127, 7
        %v1129 = vsub.s32 %v1126, %v1128
        %v1130 = vrot.slane %v1114, %v1129
        %v1132 = vunpack.c.l.s4 1966171168
        %v1133 = vunpack.c.0.s8 %v1132
        %v1134 = vlaneseq
        %v1135 = vshrl.u32 %v1134, 7
        %v1136 = vsub.s32 %v1133, %v1135
        %v1137 = vrot.slane %v1121, %v1136
        %v1139 = vunpack.c.l.s4 1966171168
        %v1140 = vunpack.c.0.s8 %v1139
        %v1141 = vlaneseq
        %v1142 = vshrl.u32 %v1141, 7
        %v1143 = vsub.s32 %v1140, %v1142
        %v1144 = vrot.slane %v1122, %v1143
        %v1146 = vunpack.c.l.s4 1966171168
        %v1147 = vunpack.c.0.s8 %v1146
        %v1148 = vlaneseq
        %v1149 = vshrl.u32 %v1148, 7
        %v1150 = vsub.s32 %v1147, %v1149
        %v1151 = vrot.slane %v1123, %v1150
        %v1152 = vcombine.high %v1130, %v1130
        %v1153 = vcombine.high %v1137, %v1137
        %v1154 = vcombine.high %v1144, %v1144
        %v1155 = vcombine.high %v1151, %v1151
        %v1156 = vlaneseq
        %v1157 = vshrl.u32 %v1156, 7
        %v1158 = vsub.s32 0, %v1157
        %v1159 = vrot.slane %v1130, %v1158
        %v1160 = vlaneseq
        %v1161 = vshrl.u32 %v1160, 7
        %v1162 = vsub.s32 0, %v1161
        %v1163 = vrot.slane %v1144, %v1162
        %v1164 = vlaneseq
        %v1165 = vshrl.u32 %v1164, 7
        %v1166 = vsub.s32 0, %v1165
        %v1167 = vrot.slane %v1152, %v1166
        %v1168 = vlaneseq
        %v1169 = vshrl.u32 %v1168, 7
        %v1170 = vsub.s32 0, %v1169
        %v1171 = vrot.slane %v1154, %v1170
        %v1172 = vlaneseq
        %v1173 = vshrl.u32 %v1172, 7
        %v1174 = vsub.s32 0, %v1173
        %v1175 = vrot.slane %v1137, %v1174
        %v1176 = vlaneseq
        %v1177 = vshrl.u32 %v1176, 7
        %v1178 = vsub.s32 0, %v1177
        %v1179 = vrot.slane %v1151, %v1178
        %v1180 = vlaneseq
        %v1181 = vshrl.u32 %v1180, 7
        %v1182 = vsub.s32 0, %v1181
        %v1183 = vrot.slane %v1153, %v1182
        %v1184 = vlaneseq
        %v1185 = vshrl.u32 %v1184, 7
        %v1186 = vsub.s32 0, %v1185
        %v1187 = vrot.slane %v1155, %v1186
        %v1196 = vadd.f32 %v960, %v1159
        %v1197 = vadd.f32 %v1098, %v1163
        %v1198 = vadd.f32 %v965, %v1167
        %v1199 = vadd.f32 %v1099, %v1171
        %v1200 = vadd.f32 %v970, %v1175
        %v1201 = vadd.f32 %v1100, %v1179
        %v1202 = vadd.f32 %v975, %v1183
        %v1203 = vadd.f32 %v1101, %v1187
        %v1204 = vmax.f32 %v1196, 0.0
        %v1205 = vmax.f32 %v1197, 0.0
        %v1206 = vmax.f32 %v1198, 0.0
        %v1207 = vmax.f32 %v1199, 0.0
        %v1208 = vmax.f32 %v1200, 0.0
        %v1209 = vmax.f32 %v1201, 0.0
        %v1210 = vmax.f32 %v1202, 0.0
        %v1211 = vmax.f32 %v1203, 0.0
        %v1212 = vld [vmem:[#allocation10] sm:$0xff]
        %v1213 = vld [vmem:[#allocation10 + $0x8] sm:$0xff]
        %v1214 = vld [vmem:[#allocation10 + $0x10] sm:$0xff]
        %v1215 = vld [vmem:[#allocation10 + $0x18] sm:$0xff]
        %v1216 = vld [vmem:[#allocation10 + $0x20] sm:$0xff]
        %v1217 = vld [vmem:[#allocation10 + $0x28] sm:$0xff]
        %v1218 = vld [vmem:[#allocation10 + $0x30] sm:$0xff]
        %v1219 = vld [vmem:[#allocation10 + $0x38] sm:$0xff]
        %v1220 = vld [vmem:[#allocation10 + $0x40] sm:$0xff]
        %v1221 = vld [vmem:[#allocation10 + $0x48] sm:$0xff]
        %v1222 = vld [vmem:[#allocation10 + $0x50] sm:$0xff]
        %v1223 = vld [vmem:[#allocation10 + $0x58] sm:$0xff]
        %v1224 = vld [vmem:[#allocation10 + $0x60] sm:$0xff]
        %v1225 = vld [vmem:[#allocation10 + $0x68] sm:$0xff]
        %v1226 = vld [vmem:[#allocation10 + $0x70] sm:$0xff]
        %v1227 = vld [vmem:[#allocation10 + $0x78] sm:$0xff]
        %v1228 = vld [vmem:[%s9] sm:$0x1]
        %v1230 = vlaneseq
        %v1231 = vshrl.u32 %v1230, 7
        %v1232 = vsub.s32 0, %v1231
        %v1233 = vrot.slane %v1228, %v1232
        %v1243 = vcombine.low %v1204, %v1205
        %v1244 = vcombine.low %v1206, %v1207
        %v1245 = vcombine.low %v1208, %v1209
        %v1246 = vcombine.low %v1210, %v1211
        %1251 = vmatprep.subr.mxu0 0.0
        %1252 = vmatpush1.msra.mxu0 %v1212
        %1253 = vmatprep.subr.mxu0 0.0
        %1254 = vmatpush1.msra.mxu0 %v1213
        %1255 = vmatprep.subr.mxu0 0.0
        %1256 = vmatpush1.msra.mxu0 %v1214
        %1257 = vmatprep.subr.mxu0 0.0
        %1258 = vmatpush1.msra.mxu0 %v1215
        %1259 = vmatprep.subr.mxu0 0.0
        %1260 = vmatpush1.msra.mxu0 %v1216
        %1261 = vmatprep.subr.mxu0 0.0
        %1262 = vmatpush1.msra.mxu0 %v1217
        %1263 = vmatprep.subr.mxu0 0.0
        %1264 = vmatpush1.msra.mxu0 %v1218
        %1265 = vmatprep.subr.mxu0 0.0
        %1266 = vmatpush1.msra.mxu0 %v1219
        %1267 = vmatprep.subr.mxu0 0.0
        %1268 = vmatpush1.msra.mxu0 %v1220
        %1269 = vmatprep.subr.mxu0 0.0
        %1270 = vmatpush1.msra.mxu0 %v1221
        %1271 = vmatprep.subr.mxu0 0.0
        %1272 = vmatpush1.msra.mxu0 %v1222
        %1273 = vmatprep.subr.mxu0 0.0
        %1274 = vmatpush1.msra.mxu0 %v1223
        %1275 = vmatprep.subr.mxu0 0.0
        %1276 = vmatpush1.msra.mxu0 %v1224
        %1277 = vmatprep.subr.mxu0 0.0
        %1278 = vmatpush1.msra.mxu0 %v1225
        %1279 = vmatprep.subr.mxu0 0.0
        %1280 = vmatpush1.msra.mxu0 %v1226
        %1281 = vmatprep.subr.mxu0 0.0
        %1282 = vmatpush1.msra.mxu0 %v1227
        %1283 = vmatprep.subr.mxu0 0.0
        %1284 = vmatpush1.msra.mxu0 0.0
        %1285 = vmatprep.subr.mxu0 0.0
        %1286 = vmatpush1.msra.mxu0 0.0
        %1287 = vmatprep.subr.mxu0 0.0
        %1288 = vmatpush1.msra.mxu0 0.0
        %1289 = vmatprep.subr.mxu0 0.0
        %1290 = vmatpush1.msra.mxu0 0.0
        %1291 = vmatprep.subr.mxu0 0.0
        %1292 = vmatpush1.msra.mxu0 0.0
        %1293 = vmatprep.subr.mxu0 0.0
        %1294 = vmatpush1.msra.mxu0 0.0
        %1295 = vmatprep.subr.mxu0 0.0
        %1296 = vmatpush1.msra.mxu0 0.0
        %1297 = vmatprep.subr.mxu0 0.0
        %1298 = vmatpush1.msra.mxu0 0.0
        %1299 = vmatprep.subr.mxu0 0.0
        %1300 = vmatpush1.msra.mxu0 0.0
        %1301 = vmatprep.subr.mxu0 0.0
        %1302 = vmatpush1.msra.mxu0 0.0
        %1303 = vmatprep.subr.mxu0 0.0
        %1304 = vmatpush1.msra.mxu0 0.0
        %1305 = vmatprep.subr.mxu0 0.0
        %1306 = vmatpush1.msra.mxu0 0.0
        %1307 = vmatprep.subr.mxu0 0.0
        %1308 = vmatpush1.msra.mxu0 0.0
        %1309 = vmatprep.subr.mxu0 0.0
        %1310 = vmatpush1.msra.mxu0 0.0
        %1311 = vmatprep.subr.mxu0 0.0
        %1312 = vmatpush1.msra.mxu0 0.0
        %1313 = vmatprep.subr.mxu0 0.0
        %1314 = vmatpush1.msra.mxu0 0.0
        %1315 = vmatprep.mubr.f32.mxu0 0.0
        %1316 = vmatmul.mubr.f32.gmra.mrb[0].mxu0 %v1243
        %v1317 = vpop.f32.mrb[0].mxu0
        %v1318 = vadd.f32 %v1233, %v1317
        %v1319 = vpop.f32.mrb[0].mxu0
        %1320 = vmatprep.mubr.f32.mxu0 0.0
        %1321 = vmatmul.mubr.f32.gmra.mrb[0].mxu0 %v1244
        %v1322 = vpop.f32.mrb[0].mxu0
        %v1323 = vadd.f32 %v1233, %v1322
        %v1324 = vpop.f32.mrb[0].mxu0
        %1325 = vmatprep.mubr.f32.mxu0 0.0
        %1326 = vmatmul.mubr.f32.gmra.mrb[0].mxu0 %v1245
        %v1327 = vpop.f32.mrb[0].mxu0
        %v1328 = vadd.f32 %v1233, %v1327
        %v1329 = vpop.f32.mrb[0].mxu0
        %1330 = vmatprep.mubr.f32.mxu0 0.0
        %1331 = vmatmul.mubr.f32.gmra.mrb[0].mxu0 %v1246
        %v1332 = vpop.f32.mrb[0].mxu0
        %v1333 = vadd.f32 %v1233, %v1332
        %v1334 = vpop.f32.mrb[0].mxu0
        %1335 = vdwg.mxu0
        %v1336 = vmax.f32 %v1318, 0.0
        %v1337 = vmax.f32 %v1323, 0.0
        %v1338 = vmax.f32 %v1328, 0.0
        %v1339 = vmax.f32 %v1333, 0.0
        %v1340 = vmul.f32 %v1336, %v692
        %v1341 = vmul.f32 %v1337, %v697
        %v1342 = vmul.f32 %v1338, %v702
        %v1343 = vmul.f32 %v1339, %v707
        %v1348 = vcombine.high %v1340, %v1340
        %v1349 = vcombine.high %v1341, %v1341
        %v1350 = vcombine.high %v1342, %v1342
        %v1351 = vcombine.high %v1343, %v1343
        %v1356 = vsel %vm722, %v1340, -inf
        %v1357 = vrot.slane %v1356, 4
        %v1358 = vmax.f32 %v1356, %v1357
        %v1359 = vrot.slane %v1358, 2
        %v1360 = vmax.f32 %v1358, %v1359
        %v1361 = vrot.slane %v1360, 1
        %v1362 = vmax.f32 %v1360, %v1361
        %v1363 = vsel %vm722, %v1348, -inf
        %v1364 = vrot.slane %v1363, 4
        %v1365 = vmax.f32 %v1363, %v1364
        %v1366 = vrot.slane %v1365, 2
        %v1367 = vmax.f32 %v1365, %v1366
        %v1368 = vrot.slane %v1367, 1
        %v1369 = vmax.f32 %v1367, %v1368
        %v1370 = vsel %vm722, %v1341, -inf
        %v1371 = vrot.slane %v1370, 4
        %v1372 = vmax.f32 %v1370, %v1371
        %v1373 = vrot.slane %v1372, 2
        %v1374 = vmax.f32 %v1372, %v1373
        %v1375 = vrot.slane %v1374, 1
        %v1376 = vmax.f32 %v1374, %v1375
        %v1377 = vsel %vm722, %v1349, -inf
        %v1378 = vrot.slane %v1377, 4
        %v1379 = vmax.f32 %v1377, %v1378
        %v1380 = vrot.slane %v1379, 2
        %v1381 = vmax.f32 %v1379, %v1380
        %v1382 = vrot.slane %v1381, 1
        %v1383 = vmax.f32 %v1381, %v1382
        %v1384 = vsel %vm722, %v1342, -inf
        %v1385 = vrot.slane %v1384, 4
        %v1386 = vmax.f32 %v1384, %v1385
        %v1387 = vrot.slane %v1386, 2
        %v1388 = vmax.f32 %v1386, %v1387
        %v1389 = vrot.slane %v1388, 1
        %v1390 = vmax.f32 %v1388, %v1389
        %v1391 = vsel %vm722, %v1350, -inf
        %v1392 = vrot.slane %v1391, 4
        %v1393 = vmax.f32 %v1391, %v1392
        %v1394 = vrot.slane %v1393, 2
        %v1395 = vmax.f32 %v1393, %v1394
        %v1396 = vrot.slane %v1395, 1
        %v1397 = vmax.f32 %v1395, %v1396
        %v1398 = vsel %vm722, %v1343, -inf
        %v1399 = vrot.slane %v1398, 4
        %v1400 = vmax.f32 %v1398, %v1399
        %v1401 = vrot.slane %v1400, 2
        %v1402 = vmax.f32 %v1400, %v1401
        %v1403 = vrot.slane %v1402, 1
        %v1404 = vmax.f32 %v1402, %v1403
        %v1405 = vsel %vm722, %v1351, -inf
        %v1406 = vrot.slane %v1405, 4
        %v1407 = vmax.f32 %v1405, %v1406
        %v1408 = vrot.slane %v1407, 2
        %v1409 = vmax.f32 %v1407, %v1408
        %v1410 = vrot.slane %v1409, 1
        %v1411 = vmax.f32 %v1409, %v1410
        %v1420 = vsel %vm787, %v1369, %v1362
        %v1421 = vsel %vm789, %v1376, %v1420
        %v1422 = vsel %vm791, %v1383, %v1421
        %v1423 = vsel %vm793, %v1390, %v1422
        %v1424 = vsel %vm795, %v1397, %v1423
        %v1425 = vsel %vm797, %v1404, %v1424
        %v1426 = vsel %vm799, %v1411, %v1425
        %1428 = vrot.lane.b32.xlu0 %v1426, 64
        %v1429 = vpop.permute.xlu0 %1428
        %v1431 = vrot.slane %v1429, 1
        %v1432 = vrot.slane %v1429, 2
        %v1433 = vrot.slane %v1429, 3
        %v1434 = vrot.slane %v1429, 4
        %v1435 = vrot.slane %v1429, 5
        %v1436 = vrot.slane %v1429, 6
        %v1437 = vrot.slane %v1429, 7
        %v1446 = vmax.f32 %v1362, %v1429
        %v1447 = vmax.f32 %v1369, %v1431
        %v1448 = vmax.f32 %v1376, %v1432
        %v1449 = vmax.f32 %v1383, %v1433
        %v1450 = vmax.f32 %v1390, %v1434
        %v1451 = vmax.f32 %v1397, %v1435
        %v1452 = vmax.f32 %v1404, %v1436
        %v1453 = vmax.f32 %v1411, %v1437
        %v1462 = vrot.slane %v1447, 7
        %v1463 = vsel %vm787, %v1462, %v1446
        %v1464 = vrot.slane %v1448, 6
        %v1465 = vsel %vm789, %v1464, %v1463
        %v1466 = vrot.slane %v1449, 5
        %v1467 = vsel %vm791, %v1466, %v1465
        %v1468 = vrot.slane %v1450, 4
        %v1469 = vsel %vm793, %v1468, %v1467
        %v1470 = vrot.slane %v1451, 3
        %v1471 = vsel %vm795, %v1470, %v1469
        %v1472 = vrot.slane %v1452, 2
        %v1473 = vsel %vm797, %v1472, %v1471
        %v1474 = vrot.slane %v1453, 1
        %v1475 = vsel %vm799, %v1474, %v1473
        %1477 = vrot.lane.b32.xlu0 %v1475, 32
        %v1478 = vpop.permute.xlu0 %1477
        %v1480 = vrot.slane %v1478, 1
        %v1481 = vrot.slane %v1478, 2
        %v1482 = vrot.slane %v1478, 3
        %v1483 = vrot.slane %v1478, 4
        %v1484 = vrot.slane %v1478, 5
        %v1485 = vrot.slane %v1478, 6
        %v1486 = vrot.slane %v1478, 7
        %v1495 = vmax.f32 %v1446, %v1478
        %v1496 = vmax.f32 %v1447, %v1480
        %v1497 = vmax.f32 %v1448, %v1481
        %v1498 = vmax.f32 %v1449, %v1482
        %v1499 = vmax.f32 %v1450, %v1483
        %v1500 = vmax.f32 %v1451, %v1484
        %v1501 = vmax.f32 %v1452, %v1485
        %v1502 = vmax.f32 %v1453, %v1486
        %v1507 = vcombine.high %v692, %v692
        %v1508 = vcombine.high %v697, %v697
        %v1509 = vcombine.high %v702, %v702
        %v1510 = vcombine.high %v707, %v707
        %v1515 = vsel %vm722, %v692, -inf
        %v1516 = vrot.slane %v1515, 4
        %v1517 = vmax.f32 %v1515, %v1516
        %v1518 = vrot.slane %v1517, 2
        %v1519 = vmax.f32 %v1517, %v1518
        %v1520 = vrot.slane %v1519, 1
        %v1521 = vmax.f32 %v1519, %v1520
        %v1522 = vsel %vm722, %v1507, -inf
        %v1523 = vrot.slane %v1522, 4
        %v1524 = vmax.f32 %v1522, %v1523
        %v1525 = vrot.slane %v1524, 2
        %v1526 = vmax.f32 %v1524, %v1525
        %v1527 = vrot.slane %v1526, 1
        %v1528 = vmax.f32 %v1526, %v1527
        %v1529 = vsel %vm722, %v697, -inf
        %v1530 = vrot.slane %v1529, 4
        %v1531 = vmax.f32 %v1529, %v1530
        %v1532 = vrot.slane %v1531, 2
        %v1533 = vmax.f32 %v1531, %v1532
        %v1534 = vrot.slane %v1533, 1
        %v1535 = vmax.f32 %v1533, %v1534
        %v1536 = vsel %vm722, %v1508, -inf
        %v1537 = vrot.slane %v1536, 4
        %v1538 = vmax.f32 %v1536, %v1537
        %v1539 = vrot.slane %v1538, 2
        %v1540 = vmax.f32 %v1538, %v1539
        %v1541 = vrot.slane %v1540, 1
        %v1542 = vmax.f32 %v1540, %v1541
        %v1543 = vsel %vm722, %v702, -inf
        %v1544 = vrot.slane %v1543, 4
        %v1545 = vmax.f32 %v1543, %v1544
        %v1546 = vrot.slane %v1545, 2
        %v1547 = vmax.f32 %v1545, %v1546
        %v1548 = vrot.slane %v1547, 1
        %v1549 = vmax.f32 %v1547, %v1548
        %v1550 = vsel %vm722, %v1509, -inf
        %v1551 = vrot.slane %v1550, 4
        %v1552 = vmax.f32 %v1550, %v1551
        %v1553 = vrot.slane %v1552, 2
        %v1554 = vmax.f32 %v1552, %v1553
        %v1555 = vrot.slane %v1554, 1
        %v1556 = vmax.f32 %v1554, %v1555
        %v1557 = vsel %vm722, %v707, -inf
        %v1558 = vrot.slane %v1557, 4
        %v1559 = vmax.f32 %v1557, %v1558
        %v1560 = vrot.slane %v1559, 2
        %v1561 = vmax.f32 %v1559, %v1560
        %v1562 = vrot.slane %v1561, 1
        %v1563 = vmax.f32 %v1561, %v1562
        %v1564 = vsel %vm722, %v1510, -inf
        %v1565 = vrot.slane %v1564, 4
        %v1566 = vmax.f32 %v1564, %v1565
        %v1567 = vrot.slane %v1566, 2
        %v1568 = vmax.f32 %v1566, %v1567
        %v1569 = vrot.slane %v1568, 1
        %v1570 = vmax.f32 %v1568, %v1569
        %v1579 = vsel %vm787, %v1528, %v1521
        %v1580 = vsel %vm789, %v1535, %v1579
        %v1581 = vsel %vm791, %v1542, %v1580
        %v1582 = vsel %vm793, %v1549, %v1581
        %v1583 = vsel %vm795, %v1556, %v1582
        %v1584 = vsel %vm797, %v1563, %v1583
        %v1585 = vsel %vm799, %v1570, %v1584
        %1587 = vrot.lane.b32.xlu0 %v1585, 64
        %v1588 = vpop.permute.xlu0 %1587
        %v1590 = vrot.slane %v1588, 1
        %v1591 = vrot.slane %v1588, 2
        %v1592 = vrot.slane %v1588, 3
        %v1593 = vrot.slane %v1588, 4
        %v1594 = vrot.slane %v1588, 5
        %v1595 = vrot.slane %v1588, 6
        %v1596 = vrot.slane %v1588, 7
        %v1605 = vmax.f32 %v1521, %v1588
        %v1606 = vmax.f32 %v1528, %v1590
        %v1607 = vmax.f32 %v1535, %v1591
        %v1608 = vmax.f32 %v1542, %v1592
        %v1609 = vmax.f32 %v1549, %v1593
        %v1610 = vmax.f32 %v1556, %v1594
        %v1611 = vmax.f32 %v1563, %v1595
        %v1612 = vmax.f32 %v1570, %v1596
        %v1621 = vrot.slane %v1606, 7
        %v1622 = vsel %vm787, %v1621, %v1605
        %v1623 = vrot.slane %v1607, 6
        %v1624 = vsel %vm789, %v1623, %v1622
        %v1625 = vrot.slane %v1608, 5
        %v1626 = vsel %vm791, %v1625, %v1624
        %v1627 = vrot.slane %v1609, 4
        %v1628 = vsel %vm793, %v1627, %v1626
        %v1629 = vrot.slane %v1610, 3
        %v1630 = vsel %vm795, %v1629, %v1628
        %v1631 = vrot.slane %v1611, 2
        %v1632 = vsel %vm797, %v1631, %v1630
        %v1633 = vrot.slane %v1612, 1
        %v1634 = vsel %vm799, %v1633, %v1632
        %1636 = vrot.lane.b32.xlu0 %v1634, 32
        %v1637 = vpop.permute.xlu0 %1636
        %v1639 = vrot.slane %v1637, 1
        %v1640 = vrot.slane %v1637, 2
        %v1641 = vrot.slane %v1637, 3
        %v1642 = vrot.slane %v1637, 4
        %v1643 = vrot.slane %v1637, 5
        %v1644 = vrot.slane %v1637, 6
        %v1645 = vrot.slane %v1637, 7
        %v1654 = vmax.f32 %v1605, %v1637
        %v1655 = vmax.f32 %v1606, %v1639
        %v1656 = vmax.f32 %v1607, %v1640
        %v1657 = vmax.f32 %v1608, %v1641
        %v1658 = vmax.f32 %v1609, %v1642
        %v1659 = vmax.f32 %v1610, %v1643
        %v1660 = vmax.f32 %v1611, %v1644
        %v1661 = vmax.f32 %v1612, %v1645
        %v1662 = vld [vmem:[%s6] sm:$0xff]
        %v1663 = vld [vmem:[%s6 + $0x8] sm:$0xff]
        %v1664 = vld [vmem:[%s6 + $0x10] sm:$0xff]
        %v1665 = vld [vmem:[%s6 + $0x18] sm:$0xff]
        %v1666 = vld [vmem:[%s6 + $0x20] sm:$0xff]
        %v1667 = vld [vmem:[%s6 + $0x28] sm:$0xff]
        %v1668 = vld [vmem:[%s6 + $0x30] sm:$0xff]
        %v1669 = vld [vmem:[%s6 + $0x38] sm:$0xff]
        %v1670 = vld [vmem:[%s6 + $0x40] sm:$0xff]
        %v1671 = vld [vmem:[%s6 + $0x48] sm:$0xff]
        %v1672 = vld [vmem:[%s6 + $0x50] sm:$0xff]
        %v1673 = vld [vmem:[%s6 + $0x58] sm:$0xff]
        %v1674 = vld [vmem:[%s6 + $0x60] sm:$0xff]
        %v1675 = vld [vmem:[%s6 + $0x68] sm:$0xff]
        %v1676 = vld [vmem:[%s6 + $0x70] sm:$0xff]
        %v1677 = vld [vmem:[%s6 + $0x78] sm:$0xff]
        %v1678 = vld [vmem:[%s10] sm:$0x1]
        %v1680 = vlaneseq
        %v1681 = vshrl.u32 %v1680, 7
        %v1682 = vsub.s32 0, %v1681
        %v1683 = vrot.slane %v1678, %v1682
        %v1693 = vrot.slane %v1496, 7
        %v1694 = vsel %vm787, %v1693, %v1495
        %v1695 = vrot.slane %v1497, 6
        %v1696 = vsel %vm789, %v1695, %v1694
        %v1697 = vrot.slane %v1498, 5
        %v1698 = vsel %vm791, %v1697, %v1696
        %v1699 = vrot.slane %v1499, 4
        %v1700 = vsel %vm793, %v1699, %v1698
        %v1701 = vrot.slane %v1500, 3
        %v1702 = vsel %vm795, %v1701, %v1700
        %v1703 = vrot.slane %v1501, 2
        %v1704 = vsel %vm797, %v1703, %v1702
        %v1705 = vrot.slane %v1502, 1
        %v1706 = vsel %vm799, %v1705, %v1704
        %1708 = vmatprep.subr.mxu0 0.0
        %1709 = vmatpush1.msra.mxu0 %v1662
        %1710 = vmatprep.subr.mxu0 0.0
        %1711 = vmatpush1.msra.mxu0 %v1663
        %1712 = vmatprep.subr.mxu0 0.0
        %1713 = vmatpush1.msra.mxu0 %v1664
        %1714 = vmatprep.subr.mxu0 0.0
        %1715 = vmatpush1.msra.mxu0 %v1665
        %1716 = vmatprep.subr.mxu0 0.0
        %1717 = vmatpush1.msra.mxu0 %v1666
        %1718 = vmatprep.subr.mxu0 0.0
        %1719 = vmatpush1.msra.mxu0 %v1667
        %1720 = vmatprep.subr.mxu0 0.0
        %1721 = vmatpush1.msra.mxu0 %v1668
        %1722 = vmatprep.subr.mxu0 0.0
        %1723 = vmatpush1.msra.mxu0 %v1669
        %1724 = vmatprep.subr.mxu0 0.0
        %1725 = vmatpush1.msra.mxu0 %v1670
        %1726 = vmatprep.subr.mxu0 0.0
        %1727 = vmatpush1.msra.mxu0 %v1671
        %1728 = vmatprep.subr.mxu0 0.0
        %1729 = vmatpush1.msra.mxu0 %v1672
        %1730 = vmatprep.subr.mxu0 0.0
        %1731 = vmatpush1.msra.mxu0 %v1673
        %1732 = vmatprep.subr.mxu0 0.0
        %1733 = vmatpush1.msra.mxu0 %v1674
        %1734 = vmatprep.subr.mxu0 0.0
        %1735 = vmatpush1.msra.mxu0 %v1675
        %1736 = vmatprep.subr.mxu0 0.0
        %1737 = vmatpush1.msra.mxu0 %v1676
        %1738 = vmatprep.subr.mxu0 0.0
        %1739 = vmatpush1.msra.mxu0 %v1677
        %1740 = vmatprep.subr.mxu0 0.0
        %1741 = vmatpush1.msra.mxu0 0.0
        %1742 = vmatprep.subr.mxu0 0.0
        %1743 = vmatpush1.msra.mxu0 0.0
        %1744 = vmatprep.subr.mxu0 0.0
        %1745 = vmatpush1.msra.mxu0 0.0
        %1746 = vmatprep.subr.mxu0 0.0
        %1747 = vmatpush1.msra.mxu0 0.0
        %1748 = vmatprep.subr.mxu0 0.0
        %1749 = vmatpush1.msra.mxu0 0.0
        %1750 = vmatprep.subr.mxu0 0.0
        %1751 = vmatpush1.msra.mxu0 0.0
        %1752 = vmatprep.subr.mxu0 0.0
        %1753 = vmatpush1.msra.mxu0 0.0
        %1754 = vmatprep.subr.mxu0 0.0
        %1755 = vmatpush1.msra.mxu0 0.0
        %1756 = vmatprep.subr.mxu0 0.0
        %1757 = vmatpush1.msra.mxu0 0.0
        %1758 = vmatprep.subr.mxu0 0.0
        %1759 = vmatpush1.msra.mxu0 0.0
        %1760 = vmatprep.subr.mxu0 0.0
        %1761 = vmatpush1.msra.mxu0 0.0
        %1762 = vmatprep.subr.mxu0 0.0
        %1763 = vmatpush1.msra.mxu0 0.0
        %1764 = vmatprep.subr.mxu0 0.0
        %1765 = vmatpush1.msra.mxu0 0.0
        %1766 = vmatprep.subr.mxu0 0.0
        %1767 = vmatpush1.msra.mxu0 0.0
        %1768 = vmatprep.subr.mxu0 0.0
        %1769 = vmatpush1.msra.mxu0 0.0
        %1770 = vmatprep.subr.mxu0 0.0
        %1771 = vmatpush1.msra.mxu0 0.0
        %1772 = vmatprep.mubr.f32.mxu0 0.0
        %1773 = vmatmul.mubr.f32.gmra.mrb[0].mxu0 %v1706
        %v1774 = vpop.f32.mrb[0].mxu0
        %v1775 = vadd.f32 %v1683, %v1774
        %v1776 = vpop.f32.mrb[0].mxu0
        %1777 = vdwg.mxu0
        %v1778 = vmax.f32 %v1775, 0.0
        %v1779 = vld [vmem:[%s7] sm:$0xff]
        %v1780 = vld [vmem:[%s7 + $0x8] sm:$0xff]
        %v1781 = vld [vmem:[%s7 + $0x10] sm:$0xff]
        %v1782 = vld [vmem:[%s7 + $0x18] sm:$0xff]
        %v1783 = vld [vmem:[%s11] sm:$0x1]
        %v1785 = vlaneseq
        %v1786 = vshrl.u32 %v1785, 7
        %v1787 = vsub.s32 0, %v1786
        %v1788 = vrot.slane %v1783, %v1787
        %vm1790 = vcmask 261120
        %v1792 = vsel %vm1790, %v1778, 0
        %1794 = vmatprep.subr.mxu0 0.0
        %1795 = vmatpush1.msra.mxu0 %v1779
        %1796 = vmatprep.subr.mxu0 0.0
        %1797 = vmatpush1.msra.mxu0 %v1780
        %1798 = vmatprep.subr.mxu0 0.0
        %1799 = vmatpush1.msra.mxu0 %v1781
        %1800 = vmatprep.subr.mxu0 0.0
        %1801 = vmatpush1.msra.mxu0 %v1782
        %1802 = vmatprep.subr.mxu0 0.0
        %1803 = vmatpush1.msra.mxu0 0.0
        %1804 = vmatprep.subr.mxu0 0.0
        %1805 = vmatpush1.msra.mxu0 0.0
        %1806 = vmatprep.subr.mxu0 0.0
        %1807 = vmatpush1.msra.mxu0 0.0
        %1808 = vmatprep.subr.mxu0 0.0
        %1809 = vmatpush1.msra.mxu0 0.0
        %1810 = vmatprep.subr.mxu0 0.0
        %1811 = vmatpush1.msra.mxu0 0.0
        %1812 = vmatprep.subr.mxu0 0.0
        %1813 = vmatpush1.msra.mxu0 0.0
        %1814 = vmatprep.subr.mxu0 0.0
        %1815 = vmatpush1.msra.mxu0 0.0
        %1816 = vmatprep.subr.mxu0 0.0
        %1817 = vmatpush1.msra.mxu0 0.0
        %1818 = vmatprep.subr.mxu0 0.0
        %1819 = vmatpush1.msra.mxu0 0.0
        %1820 = vmatprep.subr.mxu0 0.0
        %1821 = vmatpush1.msra.mxu0 0.0
        %1822 = vmatprep.subr.mxu0 0.0
        %1823 = vmatpush1.msra.mxu0 0.0
        %1824 = vmatprep.subr.mxu0 0.0
        %1825 = vmatpush1.msra.mxu0 0.0
        %1826 = vmatprep.subr.mxu0 0.0
        %1827 = vmatpush1.msra.mxu0 0.0
        %1828 = vmatprep.subr.mxu0 0.0
        %1829 = vmatpush1.msra.mxu0 0.0
        %1830 = vmatprep.subr.mxu0 0.0
        %1831 = vmatpush1.msra.mxu0 0.0
        %1832 = vmatprep.subr.mxu0 0.0
        %1833 = vmatpush1.msra.mxu0 0.0
        %1834 = vmatprep.subr.mxu0 0.0
        %1835 = vmatpush1.msra.mxu0 0.0
        %1836 = vmatprep.subr.mxu0 0.0
        %1837 = vmatpush1.msra.mxu0 0.0
        %1838 = vmatprep.subr.mxu0 0.0
        %1839 = vmatpush1.msra.mxu0 0.0
        %1840 = vmatprep.subr.mxu0 0.0
        %1841 = vmatpush1.msra.mxu0 0.0
        %1842 = vmatprep.subr.mxu0 0.0
        %1843 = vmatpush1.msra.mxu0 0.0
        %1844 = vmatprep.subr.mxu0 0.0
        %1845 = vmatpush1.msra.mxu0 0.0
        %1846 = vmatprep.subr.mxu0 0.0
        %1847 = vmatpush1.msra.mxu0 0.0
        %1848 = vmatprep.subr.mxu0 0.0
        %1849 = vmatpush1.msra.mxu0 0.0
        %1850 = vmatprep.subr.mxu0 0.0
        %1851 = vmatpush1.msra.mxu0 0.0
        %1852 = vmatprep.subr.mxu0 0.0
        %1853 = vmatpush1.msra.mxu0 0.0
        %1854 = vmatprep.subr.mxu0 0.0
        %1855 = vmatpush1.msra.mxu0 0.0
        %1856 = vmatprep.subr.mxu0 0.0
        %1857 = vmatpush1.msra.mxu0 0.0
        %1858 = vmatprep.mubr.f32.mxu0 0.0
        %1859 = vmatmul.mubr.f32.gmra.mrb[0].mxu0 %v1792
        %v1860 = vpop.f32.mrb[0].mxu0
        %v1861 = vadd.f32 %v1788, %v1860
        %v1862 = vpop.f32.mrb[0].mxu0
        %1863 = vdwg.mxu0
        %1865 = vset.pattern.permute.xlu0 0
        %1866 = vperm.xlu0 %1865, %v1654
        %v1867 = vpop.permute.xlu0 %1866
        %1869 = vset.pattern.permute.xlu0 0
        %1870 = vperm.xlu0 %1869, %v1655
        %v1871 = vpop.permute.xlu0 %1870
        %1873 = vset.pattern.permute.xlu0 0
        %1874 = vperm.xlu0 %1873, %v1656
        %v1875 = vpop.permute.xlu0 %1874
        %1877 = vset.pattern.permute.xlu0 0
        %1878 = vperm.xlu0 %1877, %v1657
        %v1879 = vpop.permute.xlu0 %1878
        %1881 = vset.pattern.permute.xlu0 0
        %1882 = vperm.xlu0 %1881, %v1658
        %v1883 = vpop.permute.xlu0 %1882
        %1885 = vset.pattern.permute.xlu0 0
        %1886 = vperm.xlu0 %1885, %v1659
        %v1887 = vpop.permute.xlu0 %1886
        %1889 = vset.pattern.permute.xlu0 0
        %1890 = vperm.xlu0 %1889, %v1660
        %v1891 = vpop.permute.xlu0 %1890
        %1893 = vset.pattern.permute.xlu0 0
        %1894 = vperm.xlu0 %1893, %v1661
        %v1895 = vpop.permute.xlu0 %1894
        %v1896 = vrot.slane %v1871, 7
        %v1897 = vsel %vm787, %v1896, %v1867
        %v1898 = vrot.slane %v1875, 6
        %v1899 = vsel %vm789, %v1898, %v1897
        %v1900 = vrot.slane %v1879, 5
        %v1901 = vsel %vm791, %v1900, %v1899
        %v1902 = vrot.slane %v1883, 4
        %v1903 = vsel %vm793, %v1902, %v1901
        %v1904 = vrot.slane %v1887, 3
        %v1905 = vsel %vm795, %v1904, %v1903
        %v1906 = vrot.slane %v1891, 2
        %v1907 = vsel %vm797, %v1906, %v1905
        %v1908 = vrot.slane %v1895, 1
        %v1909 = vsel %vm799, %v1908, %v1907
        %v1911 = vmul.f32 %v1861, %v1909
        %1912 = vst.msk [vmem:[%s489] sm:$0xff] %vm519, %v1911
        %s1913 = sand.u32 %s296, 1
        %s1914 = scalar_lea.sflag [#allocation4], %s1913
        %s1915 = sand.u32 %s296, 1
        %s1916 = smul.addr %s1915, 8
        %s1917 = scalar_lea.vmem [#allocation11], %s1916
        // Predicated region
        $region89: #{tpu_custom_call.1} parent=67 // pred_check
          %p1918 = pneg %p306
        $region90: #{tpu_custom_call.1} parent=67 // pred_check_branch
          %1920 = sbr.rel (%p1918) target = $region92
        $region91: #{tpu_custom_call.1} parent=67 // pred_region
          %s1922 = ssub.s32 128, 128
          %1923 = vsyncadd %s1914, %s1922
          %s1924 = smul.addr %s31, 128
          %s1925 = scalar_lea.hbm %s12, %s1924
          %s1927 = sshll.u32 %s1917, 4
          %s1928 = int_to_ptr.vmem [resolvable:$true] %s1927
          %1930 = dma.vmem_to_hbm [thread:$0]  %s1928, 128, %s1925, %s1914
        $region92: #{tpu_custom_call.1} parent=67 // pred_fallthru
          _
      $region68: #{tpu_custom_call.1} parent=5 // pred_fallthru
        _
      %p1931 = scmp.le.s32.totalorder 2, %s26
      // Predicated region
      $region93: #{tpu_custom_call.1} parent=5 // pred_check
        %p1932 = pneg %p1931
      $region94: #{tpu_custom_call.1} parent=5 // pred_check_branch
        %1934 = sbr.rel (%p1932) target = $region96
      $region95: #{tpu_custom_call.1} parent=5 // pred_region
        %s1935 = ssub.s32 %s26, 2
        // Predicated region
        $region97: #{tpu_custom_call.1} parent=95 // pred_check
          %p1936 = pneg %p312
        $region98: #{tpu_custom_call.1} parent=95 // pred_check_branch
          %1938 = sbr.rel (%p1936) target = $region100
        $region99: #{tpu_custom_call.1} parent=95 // pred_region
          %s1939 = sand.u32 %s297, 1
          %s1940 = scalar_lea.sflag [#allocation4], %s1939
          %s1941 = sand.u32 %s297, 1
          %s1942 = smul.addr %s1941, 8
          %s1943 = scalar_lea.vmem [#allocation11], %s1942
          %1944 = dma.done %s1940, 128
        $region100: #{tpu_custom_call.1} parent=95 // pred_fallthru
          _
      $region96: #{tpu_custom_call.1} parent=5 // pred_fallthru
        _
    $region6: #{tpu_custom_call.1} parent=1 // loop_footer
      %s30 = sadd.s32 1, %s26
    $region7: #{tpu_custom_call.1} parent=1 // loop_footer_branch
      %25 = sbr.rel target = $region3
    $region8: #{tpu_custom_call.1} parent=1 // loop_exit
      _
    %1945 = vsyncpa [#allocation3], 1
    %s1946 = scalar_lea.sflag [#allocation3], 1
    %1947 = vsyncpa %s1946, 1
    %1948 = vsyncpa [#allocation6], 1
    %1949 = vsyncpa [#allocation9], 1
    %1950 = vsyncpa [#allocation4], 1
    %s1951 = scalar_lea.sflag [#allocation4], 1
    %1952 = vsyncpa %s1951, 1

</llo_original>
